<compile_context>
chip_gen: v6e
topology: v6e:2x2x1
jax: 0.10.0
libtpu: 0.0.40
codegen_flags: <defaults>
</compile_context>

<pallas_src>
import functools

import jax
import jax.numpy as jnp
from jax.experimental import pallas as pl
from jax.experimental.pallas import tpu as pltpu


def _repatch_kernel(a_ref, b_ref, u0_ref, u1_ref, bias_ref, o_ref, *, n_in_ch):
    # a_ref, b_ref : (1, C, TH, W)        native NCHW input tiles
    # u0_ref,u1_ref: (C, W, P*W*P)        scatter weights for out-ch 0 / 1
    # bias_ref     : (2,) in SMEM         conv-transpose bias
    # o_ref        : (1, 2, TH, P*W*P)    == NCHW output rows [h*P, (h+1)*P)
    b0 = bias_ref[0]
    b1 = bias_ref[1]

    def patchup(x_ref, u_ref):
        # Accumulate the C channel contributions on the MXU; each dot is a
        # lane-dense (TH, W) @ (W, P*W*P) whose result is already in the
        # final NCHW row layout (no in-kernel transpose / concat needed).
        acc = jnp.dot(x_ref[0, 0], u_ref[0], preferred_element_type=jnp.float32)
        for c in range(1, n_in_ch):
            acc = acc + jnp.dot(x_ref[0, c], u_ref[c],
                                preferred_element_type=jnp.float32)
        return acc

    x1_0 = patchup(a_ref, u0_ref) + b0
    x1_1 = patchup(a_ref, u1_ref) + b1
    x2_0 = patchup(b_ref, u0_ref) + b0
    x2_1 = patchup(b_ref, u1_ref) + b1

    # Complex-product channel mix, stored with two full-lane writes.
    o_ref[0, 0] = (x1_0 * x2_0 + x1_1 * x2_1).astype(o_ref.dtype)
    o_ref[0, 1] = (x1_1 * x2_0 + x1_0 * x2_1).astype(o_ref.dtype)


def repatch_pallas(a, b, weight, bias, patch_size, *, tile_h=512,
                   out_dtype=jnp.float32):
    """a, b: [N, C, H, W] (NCHW).  weight: [C, 2, P, P].  bias: [2]."""
    N, C, H, W = a.shape
    P = patch_size
    assert weight.shape == (C, 2, P, P)
    PWP = P * W * P  # one output row of the [N, 2, H, P*W*P] view

    # Scatter weights: U[c,oc,w, ph*W*P + w'*P + pw] = wgt[c,oc,ph,pw]*(w==w')
    eye_w = jnp.eye(W, dtype=jnp.float32)
    u = jnp.einsum("copq,wv->cowpvq", weight.astype(jnp.float32), eye_w)
    u = u.reshape(C, 2, W, PWP)
    u0, u1 = u[:, 0], u[:, 1]              # (C, W, PWP) each
    bias_f = bias.astype(jnp.float32)      # (2,) -> SMEM scalars

    # Tile over H.  Keep the (2, TH, PWP) f32 output slab <= ~4 MiB so the
    # double-buffered pipeline sits comfortably inside v7x's 64 MiB VMEM.
    max_rows = max(8, (4 * 1024 * 1024) // (2 * PWP * 4))
    th = min(tile_h, max_rows)
    if th >= H:
        th = H                              # full-dim block (always legal)
    else:
        th = max(8, (th // 8) * 8)          # sublane-aligned tile
    grid = (N, pl.cdiv(H, th))              # no divisibility assert

    kernel = functools.partial(_repatch_kernel, n_in_ch=C)

    out = pl.pallas_call(
        kernel,
        out_shape=jax.ShapeDtypeStruct((N, 2, H, PWP), out_dtype),
        grid_spec=pltpu.PrefetchScalarGridSpec(
            num_scalar_prefetch=0,
            grid=grid,
            in_specs=[
                pl.BlockSpec((1, C, th, W), lambda n, h: (n, 0, h, 0)),
                pl.BlockSpec((1, C, th, W), lambda n, h: (n, 0, h, 0)),
                pl.BlockSpec((C, W, PWP), lambda n, h: (0, 0, 0)),
                pl.BlockSpec((C, W, PWP), lambda n, h: (0, 0, 0)),
                pl.BlockSpec(memory_space=pltpu.MemorySpace.SMEM),
            ],
            out_specs=pl.BlockSpec((1, 2, th, PWP), lambda n, h: (n, 0, h, 0)),
        ),
        compiler_params=pltpu.CompilerParams(
            dimension_semantics=("parallel", "parallel"),
            vmem_limit_bytes=32 * 1024 * 1024,
        ),
    )(a, b, u0, u1, bias_f)

    # [N, 2, H, P*W*P] is bit-identical (row-major) to NCHW [N, 2, H*P, W*P]:
    # this reshape is a metadata-only view, no extra HBM pass.
    return out.reshape(N, 2, H * P, W * P)


def repatch_reference(a, b, weight, bias, patch_size):
    """Pure-JAX reference with identical math (validation only)."""
    N, C, H, W = a.shape
    P = patch_size

    def patchup(x):
        y = jnp.einsum('nchw,copq->nohpwq', x, weight) \
            + bias[None, :, None, None, None, None]
        return y.reshape(N, 2, H * P, W * P)

    x1, x2 = patchup(a), patchup(b)
    sp0 = x1[:, 0] * x2[:, 0] + x1[:, 1] * x2[:, 1]
    sp1 = x1[:, 1] * x2[:, 0] + x1[:, 0] * x2[:, 1]
    return jnp.stack([sp0, sp1], axis=1)


if __name__ == "__main__":
    key = jax.random.PRNGKey(0)
    k1, k2, k3, k4 = jax.random.split(key, 4)

    N, C_in, H, W = 2, 4, 16, 16
    patch_size = 4

    a = jax.random.normal(k1, (N, C_in, H, W), dtype=jnp.float32)
    b = jax.random.normal(k2, (N, C_in, H, W), dtype=jnp.float32)

    # ConvTranspose2d(in_ch, 2, kernel_size=P, stride=P) parameters:
    # weight [in_ch, out_ch=2, P, P], bias [2].
    weight = 0.1 * jax.random.normal(k3, (C_in, 2, patch_size, patch_size),
                                     dtype=jnp.float32)
    bias = 0.1 * jax.random.normal(k4, (2,), dtype=jnp.float32)

    fn = jax.jit(repatch_pallas, static_argnums=(4,))
    out = jax.block_until_ready(fn(a, b, weight, bias, patch_size))

    ref = repatch_reference(a, b, weight, bias, patch_size)
    assert out.shape == (N, 2, H * patch_size, W * patch_size)
    assert jnp.allclose(out, ref, atol=1e-4, rtol=1e-4), \
        float(jnp.max(jnp.abs(out - ref)))

    print("KERNEL_OK")
</pallas_src>

<mosaic_0001>
module attributes {stable_mosaic.version = 11 : i64} {
  func.func @_repatch_kernel(%arg0: i32, %arg1: i32, %arg2: memref<1x4x16x16xf32, #tpu.memory_space<vmem>>, %arg3: memref<1x4x16x16xf32, #tpu.memory_space<vmem>>, %arg4: memref<4x16x256xf32, #tpu.memory_space<vmem>>, %arg5: memref<4x16x256xf32, #tpu.memory_space<vmem>>, %arg6: memref<2xf32, #tpu.memory_space<smem>>, %arg7: memref<1x2x16x256xf32, #tpu.memory_space<vmem>>) attributes {dimension_semantics = [#tpu.dimension_semantics<parallel>, #tpu.dimension_semantics<parallel>], iteration_bounds = array<i64: 2, 1>, scalar_prefetch = 0 : i64, scratch_operands = 0 : i64, tpu.core_type = #tpu.core_type<tc>, window_params = [{transform_indices = @transform_0, window_bounds = array<i64: 1, 4, 16, 16>}, {transform_indices = @transform_1, window_bounds = array<i64: 1, 4, 16, 16>}, {pipeline_mode = #tpu.pipeline_mode<synchronous>, transform_indices = @transform_2, window_bounds = array<i64: 4, 16, 256>}, {pipeline_mode = #tpu.pipeline_mode<synchronous>, transform_indices = @transform_3, window_bounds = array<i64: 4, 16, 256>}, {transform_indices = @transform_4, window_bounds = array<i64: 2>}, {transform_indices = @transform_5, window_bounds = array<i64: 1, 2, 16, 256>}]} {
    %c0 = arith.constant 0 : index
    %0 = memref.load %arg6[%c0] : memref<2xf32, #tpu.memory_space<smem>>
    %c1 = arith.constant 1 : index
    %1 = memref.load %arg6[%c1] : memref<2xf32, #tpu.memory_space<smem>>
    %c0_0 = arith.constant 0 : index
    %c0_1 = arith.constant 0 : index
    %c0_2 = arith.constant 0 : index
    %c0_3 = arith.constant 0 : index
    %2 = vector.load %arg2[%c0_0, %c0_1, %c0_2, %c0_3] : memref<1x4x16x16xf32, #tpu.memory_space<vmem>>, vector<1x1x16x16xf32>
    %3 = vector.shape_cast %2 : vector<1x1x16x16xf32> to vector<16x16xf32>
    %c0_4 = arith.constant 0 : index
    %c0_5 = arith.constant 0 : index
    %c0_6 = arith.constant 0 : index
    %4 = vector.load %arg4[%c0_4, %c0_5, %c0_6] : memref<4x16x256xf32, #tpu.memory_space<vmem>>, vector<1x16x256xf32>
    %5 = vector.shape_cast %4 : vector<1x16x256xf32> to vector<16x256xf32>
    %cst = arith.constant dense<0.000000e+00> : vector<16x256xf32>
    %6 = tpu.matmul %3, %5, %cst {dimension_numbers = #tpu.dot_dimension_numbers<[1], [0], [0], [1], [0, 0, 1, 1], [], []>} : vector<16x16xf32>, vector<16x256xf32>, vector<16x256xf32> -> vector<16x256xf32>
    %c0_7 = arith.constant 0 : index
    %c1_8 = arith.constant 1 : index
    %c0_9 = arith.constant 0 : index
    %c0_10 = arith.constant 0 : index
    %7 = vector.load %arg2[%c0_7, %c1_8, %c0_9, %c0_10] : memref<1x4x16x16xf32, #tpu.memory_space<vmem>>, vector<1x1x16x16xf32>
    %8 = vector.shape_cast %7 : vector<1x1x16x16xf32> to vector<16x16xf32>
    %c1_11 = arith.constant 1 : index
    %c0_12 = arith.constant 0 : index
    %c0_13 = arith.constant 0 : index
    %9 = vector.load %arg4[%c1_11, %c0_12, %c0_13] : memref<4x16x256xf32, #tpu.memory_space<vmem>>, vector<1x16x256xf32>
    %10 = vector.shape_cast %9 : vector<1x16x256xf32> to vector<16x256xf32>
    %cst_14 = arith.constant dense<0.000000e+00> : vector<16x256xf32>
    %11 = tpu.matmul %8, %10, %cst_14 {dimension_numbers = #tpu.dot_dimension_numbers<[1], [0], [0], [1], [0, 0, 1, 1], [], []>} : vector<16x16xf32>, vector<16x256xf32>, vector<16x256xf32> -> vector<16x256xf32>
    %12 = arith.addf %6, %11 : vector<16x256xf32>
    %c0_15 = arith.constant 0 : index
    %c2 = arith.constant 2 : index
    %c0_16 = arith.constant 0 : index
    %c0_17 = arith.constant 0 : index
    %13 = vector.load %arg2[%c0_15, %c2, %c0_16, %c0_17] : memref<1x4x16x16xf32, #tpu.memory_space<vmem>>, vector<1x1x16x16xf32>
    %14 = vector.shape_cast %13 : vector<1x1x16x16xf32> to vector<16x16xf32>
    %c2_18 = arith.constant 2 : index
    %c0_19 = arith.constant 0 : index
    %c0_20 = arith.constant 0 : index
    %15 = vector.load %arg4[%c2_18, %c0_19, %c0_20] : memref<4x16x256xf32, #tpu.memory_space<vmem>>, vector<1x16x256xf32>
    %16 = vector.shape_cast %15 : vector<1x16x256xf32> to vector<16x256xf32>
    %cst_21 = arith.constant dense<0.000000e+00> : vector<16x256xf32>
    %17 = tpu.matmul %14, %16, %cst_21 {dimension_numbers = #tpu.dot_dimension_numbers<[1], [0], [0], [1], [0, 0, 1, 1], [], []>} : vector<16x16xf32>, vector<16x256xf32>, vector<16x256xf32> -> vector<16x256xf32>
    %18 = arith.addf %12, %17 : vector<16x256xf32>
    %c0_22 = arith.constant 0 : index
    %c3 = arith.constant 3 : index
    %c0_23 = arith.constant 0 : index
    %c0_24 = arith.constant 0 : index
    %19 = vector.load %arg2[%c0_22, %c3, %c0_23, %c0_24] : memref<1x4x16x16xf32, #tpu.memory_space<vmem>>, vector<1x1x16x16xf32>
    %20 = vector.shape_cast %19 : vector<1x1x16x16xf32> to vector<16x16xf32>
    %c3_25 = arith.constant 3 : index
    %c0_26 = arith.constant 0 : index
    %c0_27 = arith.constant 0 : index
    %21 = vector.load %arg4[%c3_25, %c0_26, %c0_27] : memref<4x16x256xf32, #tpu.memory_space<vmem>>, vector<1x16x256xf32>
    %22 = vector.shape_cast %21 : vector<1x16x256xf32> to vector<16x256xf32>
    %cst_28 = arith.constant dense<0.000000e+00> : vector<16x256xf32>
    %23 = tpu.matmul %20, %22, %cst_28 {dimension_numbers = #tpu.dot_dimension_numbers<[1], [0], [0], [1], [0, 0, 1, 1], [], []>} : vector<16x16xf32>, vector<16x256xf32>, vector<16x256xf32> -> vector<16x256xf32>
    %24 = arith.addf %18, %23 : vector<16x256xf32>
    %25 = vector.broadcast %0 : f32 to vector<16x256xf32>
    %26 = arith.addf %24, %25 : vector<16x256xf32>
    %c0_29 = arith.constant 0 : index
    %c0_30 = arith.constant 0 : index
    %c0_31 = arith.constant 0 : index
    %c0_32 = arith.constant 0 : index
    %27 = vector.load %arg2[%c0_29, %c0_30, %c0_31, %c0_32] : memref<1x4x16x16xf32, #tpu.memory_space<vmem>>, vector<1x1x16x16xf32>
    %28 = vector.shape_cast %27 : vector<1x1x16x16xf32> to vector<16x16xf32>
    %c0_33 = arith.constant 0 : index
    %c0_34 = arith.constant 0 : index
    %c0_35 = arith.constant 0 : index
    %29 = vector.load %arg5[%c0_33, %c0_34, %c0_35] : memref<4x16x256xf32, #tpu.memory_space<vmem>>, vector<1x16x256xf32>
    %30 = vector.shape_cast %29 : vector<1x16x256xf32> to vector<16x256xf32>
    %cst_36 = arith.constant dense<0.000000e+00> : vector<16x256xf32>
    %31 = tpu.matmul %28, %30, %cst_36 {dimension_numbers = #tpu.dot_dimension_numbers<[1], [0], [0], [1], [0, 0, 1, 1], [], []>} : vector<16x16xf32>, vector<16x256xf32>, vector<16x256xf32> -> vector<16x256xf32>
    %c0_37 = arith.constant 0 : index
    %c1_38 = arith.constant 1 : index
    %c0_39 = arith.constant 0 : index
    %c0_40 = arith.constant 0 : index
    %32 = vector.load %arg2[%c0_37, %c1_38, %c0_39, %c0_40] : memref<1x4x16x16xf32, #tpu.memory_space<vmem>>, vector<1x1x16x16xf32>
    %33 = vector.shape_cast %32 : vector<1x1x16x16xf32> to vector<16x16xf32>
    %c1_41 = arith.constant 1 : index
    %c0_42 = arith.constant 0 : index
    %c0_43 = arith.constant 0 : index
    %34 = vector.load %arg5[%c1_41, %c0_42, %c0_43] : memref<4x16x256xf32, #tpu.memory_space<vmem>>, vector<1x16x256xf32>
    %35 = vector.shape_cast %34 : vector<1x16x256xf32> to vector<16x256xf32>
    %cst_44 = arith.constant dense<0.000000e+00> : vector<16x256xf32>
    %36 = tpu.matmul %33, %35, %cst_44 {dimension_numbers = #tpu.dot_dimension_numbers<[1], [0], [0], [1], [0, 0, 1, 1], [], []>} : vector<16x16xf32>, vector<16x256xf32>, vector<16x256xf32> -> vector<16x256xf32>
    %37 = arith.addf %31, %36 : vector<16x256xf32>
    %c0_45 = arith.constant 0 : index
    %c2_46 = arith.constant 2 : index
    %c0_47 = arith.constant 0 : index
    %c0_48 = arith.constant 0 : index
    %38 = vector.load %arg2[%c0_45, %c2_46, %c0_47, %c0_48] : memref<1x4x16x16xf32, #tpu.memory_space<vmem>>, vector<1x1x16x16xf32>
    %39 = vector.shape_cast %38 : vector<1x1x16x16xf32> to vector<16x16xf32>
    %c2_49 = arith.constant 2 : index
    %c0_50 = arith.constant 0 : index
    %c0_51 = arith.constant 0 : index
    %40 = vector.load %arg5[%c2_49, %c0_50, %c0_51] : memref<4x16x256xf32, #tpu.memory_space<vmem>>, vector<1x16x256xf32>
    %41 = vector.shape_cast %40 : vector<1x16x256xf32> to vector<16x256xf32>
    %cst_52 = arith.constant dense<0.000000e+00> : vector<16x256xf32>
    %42 = tpu.matmul %39, %41, %cst_52 {dimension_numbers = #tpu.dot_dimension_numbers<[1], [0], [0], [1], [0, 0, 1, 1], [], []>} : vector<16x16xf32>, vector<16x256xf32>, vector<16x256xf32> -> vector<16x256xf32>
    %43 = arith.addf %37, %42 : vector<16x256xf32>
    %c0_53 = arith.constant 0 : index
    %c3_54 = arith.constant 3 : index
    %c0_55 = arith.constant 0 : index
    %c0_56 = arith.constant 0 : index
    %44 = vector.load %arg2[%c0_53, %c3_54, %c0_55, %c0_56] : memref<1x4x16x16xf32, #tpu.memory_space<vmem>>, vector<1x1x16x16xf32>
    %45 = vector.shape_cast %44 : vector<1x1x16x16xf32> to vector<16x16xf32>
    %c3_57 = arith.constant 3 : index
    %c0_58 = arith.constant 0 : index
    %c0_59 = arith.constant 0 : index
    %46 = vector.load %arg5[%c3_57, %c0_58, %c0_59] : memref<4x16x256xf32, #tpu.memory_space<vmem>>, vector<1x16x256xf32>
    %47 = vector.shape_cast %46 : vector<1x16x256xf32> to vector<16x256xf32>
    %cst_60 = arith.constant dense<0.000000e+00> : vector<16x256xf32>
    %48 = tpu.matmul %45, %47, %cst_60 {dimension_numbers = #tpu.dot_dimension_numbers<[1], [0], [0], [1], [0, 0, 1, 1], [], []>} : vector<16x16xf32>, vector<16x256xf32>, vector<16x256xf32> -> vector<16x256xf32>
    %49 = arith.addf %43, %48 : vector<16x256xf32>
    %50 = vector.broadcast %1 : f32 to vector<16x256xf32>
    %51 = arith.addf %49, %50 : vector<16x256xf32>
    %c0_61 = arith.constant 0 : index
    %c0_62 = arith.constant 0 : index
    %c0_63 = arith.constant 0 : index
    %c0_64 = arith.constant 0 : index
    %52 = vector.load %arg3[%c0_61, %c0_62, %c0_63, %c0_64] : memref<1x4x16x16xf32, #tpu.memory_space<vmem>>, vector<1x1x16x16xf32>
    %53 = vector.shape_cast %52 : vector<1x1x16x16xf32> to vector<16x16xf32>
    %c0_65 = arith.constant 0 : index
    %c0_66 = arith.constant 0 : index
    %c0_67 = arith.constant 0 : index
    %54 = vector.load %arg4[%c0_65, %c0_66, %c0_67] : memref<4x16x256xf32, #tpu.memory_space<vmem>>, vector<1x16x256xf32>
    %55 = vector.shape_cast %54 : vector<1x16x256xf32> to vector<16x256xf32>
    %cst_68 = arith.constant dense<0.000000e+00> : vector<16x256xf32>
    %56 = tpu.matmul %53, %55, %cst_68 {dimension_numbers = #tpu.dot_dimension_numbers<[1], [0], [0], [1], [0, 0, 1, 1], [], []>} : vector<16x16xf32>, vector<16x256xf32>, vector<16x256xf32> -> vector<16x256xf32>
    %c0_69 = arith.constant 0 : index
    %c1_70 = arith.constant 1 : index
    %c0_71 = arith.constant 0 : index
    %c0_72 = arith.constant 0 : index
    %57 = vector.load %arg3[%c0_69, %c1_70, %c0_71, %c0_72] : memref<1x4x16x16xf32, #tpu.memory_space<vmem>>, vector<1x1x16x16xf32>
    %58 = vector.shape_cast %57 : vector<1x1x16x16xf32> to vector<16x16xf32>
    %c1_73 = arith.constant 1 : index
    %c0_74 = arith.constant 0 : index
    %c0_75 = arith.constant 0 : index
    %59 = vector.load %arg4[%c1_73, %c0_74, %c0_75] : memref<4x16x256xf32, #tpu.memory_space<vmem>>, vector<1x16x256xf32>
    %60 = vector.shape_cast %59 : vector<1x16x256xf32> to vector<16x256xf32>
    %cst_76 = arith.constant dense<0.000000e+00> : vector<16x256xf32>
    %61 = tpu.matmul %58, %60, %cst_76 {dimension_numbers = #tpu.dot_dimension_numbers<[1], [0], [0], [1], [0, 0, 1, 1], [], []>} : vector<16x16xf32>, vector<16x256xf32>, vector<16x256xf32> -> vector<16x256xf32>
    %62 = arith.addf %56, %61 : vector<16x256xf32>
    %c0_77 = arith.constant 0 : index
    %c2_78 = arith.constant 2 : index
    %c0_79 = arith.constant 0 : index
    %c0_80 = arith.constant 0 : index
    %63 = vector.load %arg3[%c0_77, %c2_78, %c0_79, %c0_80] : memref<1x4x16x16xf32, #tpu.memory_space<vmem>>, vector<1x1x16x16xf32>
    %64 = vector.shape_cast %63 : vector<1x1x16x16xf32> to vector<16x16xf32>
    %c2_81 = arith.constant 2 : index
    %c0_82 = arith.constant 0 : index
    %c0_83 = arith.constant 0 : index
    %65 = vector.load %arg4[%c2_81, %c0_82, %c0_83] : memref<4x16x256xf32, #tpu.memory_space<vmem>>, vector<1x16x256xf32>
    %66 = vector.shape_cast %65 : vector<1x16x256xf32> to vector<16x256xf32>
    %cst_84 = arith.constant dense<0.000000e+00> : vector<16x256xf32>
    %67 = tpu.matmul %64, %66, %cst_84 {dimension_numbers = #tpu.dot_dimension_numbers<[1], [0], [0], [1], [0, 0, 1, 1], [], []>} : vector<16x16xf32>, vector<16x256xf32>, vector<16x256xf32> -> vector<16x256xf32>
    %68 = arith.addf %62, %67 : vector<16x256xf32>
    %c0_85 = arith.constant 0 : index
    %c3_86 = arith.constant 3 : index
    %c0_87 = arith.constant 0 : index
    %c0_88 = arith.constant 0 : index
    %69 = vector.load %arg3[%c0_85, %c3_86, %c0_87, %c0_88] : memref<1x4x16x16xf32, #tpu.memory_space<vmem>>, vector<1x1x16x16xf32>
    %70 = vector.shape_cast %69 : vector<1x1x16x16xf32> to vector<16x16xf32>
    %c3_89 = arith.constant 3 : index
    %c0_90 = arith.constant 0 : index
    %c0_91 = arith.constant 0 : index
    %71 = vector.load %arg4[%c3_89, %c0_90, %c0_91] : memref<4x16x256xf32, #tpu.memory_space<vmem>>, vector<1x16x256xf32>
    %72 = vector.shape_cast %71 : vector<1x16x256xf32> to vector<16x256xf32>
    %cst_92 = arith.constant dense<0.000000e+00> : vector<16x256xf32>
    %73 = tpu.matmul %70, %72, %cst_92 {dimension_numbers = #tpu.dot_dimension_numbers<[1], [0], [0], [1], [0, 0, 1, 1], [], []>} : vector<16x16xf32>, vector<16x256xf32>, vector<16x256xf32> -> vector<16x256xf32>
    %74 = arith.addf %68, %73 : vector<16x256xf32>
    %75 = vector.broadcast %0 : f32 to vector<16x256xf32>
    %76 = arith.addf %74, %75 : vector<16x256xf32>
    %c0_93 = arith.constant 0 : index
    %c0_94 = arith.constant 0 : index
    %c0_95 = arith.constant 0 : index
    %c0_96 = arith.constant 0 : index
    %77 = vector.load %arg3[%c0_93, %c0_94, %c0_95, %c0_96] : memref<1x4x16x16xf32, #tpu.memory_space<vmem>>, vector<1x1x16x16xf32>
    %78 = vector.shape_cast %77 : vector<1x1x16x16xf32> to vector<16x16xf32>
    %c0_97 = arith.constant 0 : index
    %c0_98 = arith.constant 0 : index
    %c0_99 = arith.constant 0 : index
    %79 = vector.load %arg5[%c0_97, %c0_98, %c0_99] : memref<4x16x256xf32, #tpu.memory_space<vmem>>, vector<1x16x256xf32>
    %80 = vector.shape_cast %79 : vector<1x16x256xf32> to vector<16x256xf32>
    %cst_100 = arith.constant dense<0.000000e+00> : vector<16x256xf32>
    %81 = tpu.matmul %78, %80, %cst_100 {dimension_numbers = #tpu.dot_dimension_numbers<[1], [0], [0], [1], [0, 0, 1, 1], [], []>} : vector<16x16xf32>, vector<16x256xf32>, vector<16x256xf32> -> vector<16x256xf32>
    %c0_101 = arith.constant 0 : index
    %c1_102 = arith.constant 1 : index
    %c0_103 = arith.constant 0 : index
    %c0_104 = arith.constant 0 : index
    %82 = vector.load %arg3[%c0_101, %c1_102, %c0_103, %c0_104] : memref<1x4x16x16xf32, #tpu.memory_space<vmem>>, vector<1x1x16x16xf32>
    %83 = vector.shape_cast %82 : vector<1x1x16x16xf32> to vector<16x16xf32>
    %c1_105 = arith.constant 1 : index
    %c0_106 = arith.constant 0 : index
    %c0_107 = arith.constant 0 : index
    %84 = vector.load %arg5[%c1_105, %c0_106, %c0_107] : memref<4x16x256xf32, #tpu.memory_space<vmem>>, vector<1x16x256xf32>
    %85 = vector.shape_cast %84 : vector<1x16x256xf32> to vector<16x256xf32>
    %cst_108 = arith.constant dense<0.000000e+00> : vector<16x256xf32>
    %86 = tpu.matmul %83, %85, %cst_108 {dimension_numbers = #tpu.dot_dimension_numbers<[1], [0], [0], [1], [0, 0, 1, 1], [], []>} : vector<16x16xf32>, vector<16x256xf32>, vector<16x256xf32> -> vector<16x256xf32>
    %87 = arith.addf %81, %86 : vector<16x256xf32>
    %c0_109 = arith.constant 0 : index
    %c2_110 = arith.constant 2 : index
    %c0_111 = arith.constant 0 : index
    %c0_112 = arith.constant 0 : index
    %88 = vector.load %arg3[%c0_109, %c2_110, %c0_111, %c0_112] : memref<1x4x16x16xf32, #tpu.memory_space<vmem>>, vector<1x1x16x16xf32>
    %89 = vector.shape_cast %88 : vector<1x1x16x16xf32> to vector<16x16xf32>
    %c2_113 = arith.constant 2 : index
    %c0_114 = arith.constant 0 : index
    %c0_115 = arith.constant 0 : index
    %90 = vector.load %arg5[%c2_113, %c0_114, %c0_115] : memref<4x16x256xf32, #tpu.memory_space<vmem>>, vector<1x16x256xf32>
    %91 = vector.shape_cast %90 : vector<1x16x256xf32> to vector<16x256xf32>
    %cst_116 = arith.constant dense<0.000000e+00> : vector<16x256xf32>
    %92 = tpu.matmul %89, %91, %cst_116 {dimension_numbers = #tpu.dot_dimension_numbers<[1], [0], [0], [1], [0, 0, 1, 1], [], []>} : vector<16x16xf32>, vector<16x256xf32>, vector<16x256xf32> -> vector<16x256xf32>
    %93 = arith.addf %87, %92 : vector<16x256xf32>
    %c0_117 = arith.constant 0 : index
    %c3_118 = arith.constant 3 : index
    %c0_119 = arith.constant 0 : index
    %c0_120 = arith.constant 0 : index
    %94 = vector.load %arg3[%c0_117, %c3_118, %c0_119, %c0_120] : memref<1x4x16x16xf32, #tpu.memory_space<vmem>>, vector<1x1x16x16xf32>
    %95 = vector.shape_cast %94 : vector<1x1x16x16xf32> to vector<16x16xf32>
    %c3_121 = arith.constant 3 : index
    %c0_122 = arith.constant 0 : index
    %c0_123 = arith.constant 0 : index
    %96 = vector.load %arg5[%c3_121, %c0_122, %c0_123] : memref<4x16x256xf32, #tpu.memory_space<vmem>>, vector<1x16x256xf32>
    %97 = vector.shape_cast %96 : vector<1x16x256xf32> to vector<16x256xf32>
    %cst_124 = arith.constant dense<0.000000e+00> : vector<16x256xf32>
    %98 = tpu.matmul %95, %97, %cst_124 {dimension_numbers = #tpu.dot_dimension_numbers<[1], [0], [0], [1], [0, 0, 1, 1], [], []>} : vector<16x16xf32>, vector<16x256xf32>, vector<16x256xf32> -> vector<16x256xf32>
    %99 = arith.addf %93, %98 : vector<16x256xf32>
    %100 = vector.broadcast %1 : f32 to vector<16x256xf32>
    %101 = arith.addf %99, %100 : vector<16x256xf32>
    %102 = arith.mulf %26, %76 : vector<16x256xf32>
    %103 = arith.mulf %51, %101 : vector<16x256xf32>
    %104 = arith.addf %102, %103 : vector<16x256xf32>
    %c0_125 = arith.constant 0 : index
    %c0_126 = arith.constant 0 : index
    %c0_127 = arith.constant 0 : index
    %c0_128 = arith.constant 0 : index
    %105 = vector.load %arg7[%c0_125, %c0_126, %c0_127, %c0_128] : memref<1x2x16x256xf32, #tpu.memory_space<vmem>>, vector<1x1x16x256xf32>
    %106 = vector.shape_cast %105 : vector<1x1x16x256xf32> to vector<16x256xf32>
    %107 = vector.shape_cast %104 : vector<16x256xf32> to vector<1x1x16x256xf32>
    tpu.vector_store %arg7[%c0_125, %c0_126, %c0_127, %c0_128], %107 {strides = array<i32>} : memref<1x2x16x256xf32, #tpu.memory_space<vmem>>, vector<1x1x16x256xf32>,
    %108 = arith.mulf %51, %76 : vector<16x256xf32>
    %109 = arith.mulf %26, %101 : vector<16x256xf32>
    %110 = arith.addf %108, %109 : vector<16x256xf32>
    %c0_129 = arith.constant 0 : index
    %c1_130 = arith.constant 1 : index
    %c0_131 = arith.constant 0 : index
    %c0_132 = arith.constant 0 : index
    %111 = vector.load %arg7[%c0_129, %c1_130, %c0_131, %c0_132] : memref<1x2x16x256xf32, #tpu.memory_space<vmem>>, vector<1x1x16x256xf32>
    %112 = vector.shape_cast %111 : vector<1x1x16x256xf32> to vector<16x256xf32>
    %113 = vector.shape_cast %110 : vector<16x256xf32> to vector<1x1x16x256xf32>
    tpu.vector_store %arg7[%c0_129, %c1_130, %c0_131, %c0_132], %113 {strides = array<i32>} : memref<1x2x16x256xf32, #tpu.memory_space<vmem>>, vector<1x1x16x256xf32>,
    return
  }
  func.func @transform_0(%arg0: i32, %arg1: i32) -> (i32, i32, i32, i32) {
    %c0_i32 = arith.constant 0 : i32
    %c0_i32_0 = arith.constant 0 : i32
    %c0_i32_1 = arith.constant 0 : i32
    return %arg0, %c0_i32, %arg1, %c0_i32_0 : i32, i32, i32, i32
  }
  func.func @transform_1(%arg0: i32, %arg1: i32) -> (i32, i32, i32, i32) {
    %c0_i32 = arith.constant 0 : i32
    %c0_i32_0 = arith.constant 0 : i32
    %c0_i32_1 = arith.constant 0 : i32
    return %arg0, %c0_i32, %arg1, %c0_i32_0 : i32, i32, i32, i32
  }
  func.func @transform_2(%arg0: i32, %arg1: i32) -> (i32, i32, i32) {
    %c0_i32 = arith.constant 0 : i32
    %c0_i32_0 = arith.constant 0 : i32
    %c0_i32_1 = arith.constant 0 : i32
    %c0_i32_2 = arith.constant 0 : i32
    return %c0_i32, %c0_i32_0, %c0_i32_1 : i32, i32, i32
  }
  func.func @transform_3(%arg0: i32, %arg1: i32) -> (i32, i32, i32) {
    %c0_i32 = arith.constant 0 : i32
    %c0_i32_0 = arith.constant 0 : i32
    %c0_i32_1 = arith.constant 0 : i32
    %c0_i32_2 = arith.constant 0 : i32
    return %c0_i32, %c0_i32_0, %c0_i32_1 : i32, i32, i32
  }
  func.func @transform_4(%arg0: i32, %arg1: i32) -> i32 {
    %c0_i32 = arith.constant 0 : i32
    %c0_i32_0 = arith.constant 0 : i32
    return %c0_i32 : i32
  }
  func.func @transform_5(%arg0: i32, %arg1: i32) -> (i32, i32, i32, i32) {
    %c0_i32 = arith.constant 0 : i32
    %c0_i32_0 = arith.constant 0 : i32
    %c0_i32_1 = arith.constant 0 : i32
    return %arg0, %c0_i32, %arg1, %c0_i32_0 : i32, i32, i32, i32
  }
}

</mosaic_0001>

<llo_original>
// kernel: repatch_pallas.1
$region0: #{repatch_pallas.1}
  #allocation0 [shape = 'u32[]', space=smem, size = 0x4, offset = 0x4, fixed_abs, tag = 'smem constant byte address 0x4 - core index']
  #allocation1 [shape = 'u32[144,128]{1,0:T(1,128)}', space=vmem, size = 0x12000, scoped, tag = 'internal scratch']
  %s0 = inlined_call_operand.vmem [shape: f32[2,4,16,16], index: 0, kind: input, shape index: {}]
  %s1 = inlined_call_operand.vmem [shape: f32[2,4,16,16], index: 1, kind: input, shape index: {}]
  %s2 = inlined_call_operand.vmem [shape: f32[4,16,256], index: 2, kind: input, shape index: {}]
  %s3 = inlined_call_operand.vmem [shape: f32[4,16,256], index: 3, kind: input, shape index: {}]
  %s4 = inlined_call_operand.vmem [shape: f32[2], index: 4, kind: input, shape index: {}]
  %s5 = inlined_call_operand.vmem [shape: f32[2,2,16,256], index: 5, kind: output, shape index: {}]
  %s6 = sld [smem:[#allocation0]]
  $region57: #{repatch_pallas.1} parent=0
    _
  %s8 = ssub.s32 1, %s6
  %s9 = scalar_select 0, %s8, %s6
  $region1: #{repatch_pallas.1} parent=0
    #allocation2 [shape = 'u8[512]{0}', space=smem, size = 0x200, scoped, tag = 'input window, operand 4, single buffered']
    #allocation3 [shape = 's32[2]{0}', space=sflag, size = 0x8, scoped, tag = 'scoped memory for repatch_pallas.1']
    %10 = vsyncpa [#allocation3], 0
    loop: start=0, step=1, limit=4
    $region2: #{repatch_pallas.1} parent=1 // loop_pre_header
      _
    $region3: #{repatch_pallas.1} parent=1 // loop_header
      %s12 = sphi 0, %s16
      %p13 = scmp.ge.s32.totalorder %s12, 4
      %s19 = sphi 0, %s31
      %s20 = sphi 0, %s27
      %s21 = sphi 0, %s19
      %s22 = sphi 0, %s20
      %s23 = sphi 0, %s21
      %s24 = sphi 0, %s22
      %s36 = sphi 0, %s38
      %s39 = sphi 0, %s36
      %s40 = sphi 0, %s39
      %s56 = sphi 0, %s40
      %s64 = sphi 0, %s66
      %s67 = sphi 0, %s64
      %s68 = sphi 0, %s67
      %s84 = sphi 0, %s68
      %s88 = sphi 0, %s88
      %s90 = sphi 0, %s88
      %s91 = sphi 0, %s90
      %s105 = sphi 0, %s91
      %s109 = sphi 0, %s109
      %s111 = sphi 0, %s109
      %s112 = sphi 0, %s111
      %s126 = sphi 0, %s112
      %s130 = sphi 0, %s130
      %s132 = sphi 0, %s130
      %s133 = sphi 0, %s132
      %s147 = sphi 0, %s133
      %s155 = sphi 0, %s157
      %s158 = sphi 0, %s155
      %s159 = sphi 0, %s158
      %s175 = sphi 0, %s159
    $region4: #{repatch_pallas.1} parent=1 // loop_header_branch
      %15 = sbr.rel (%p13) target = $region8
    $region5: #{repatch_pallas.1} parent=1 // loop_body
      %s17 = ssub.s32 %s12, 1
      %s18 = ssub.s32 %s12, 2
      %s25 = sadd.s32 1, %s20
      %p26 = scmp.ge.s32.totalorder %s25, 1
      %s27 = scalar_select %p26, 0, %s25
      %s28 = sadd.s32 1, %s19
      %s29 = scalar_select %p26, %s28, %s19
      %p30 = scmp.ge.s32.totalorder %s29, 2
      %s31 = scalar_select %p30, 0, %s29
      %s32 = ssub.s32 %s19, %s31
      %s33 = ssub.s32 %s20, %s27
      %s34 = sor.u32 %s32, %s33
      %p35 = scmp.eq.s32.totalorder %s34, 0
      %s37 = sadd.s32 %s36, 1
      %s38 = scalar_select %p35, %s36, %s37
      %p41 = pneg %p35
      %p42 = scmp.eq.s32.totalorder %s12, 1
      %p43 = por %p41, %p42
      %p44 = scmp.ne.s32.totalorder %s36, %s39
      %p45 = scmp.eq.s32.totalorder %s12, 0
      %p46 = por %p44, %p45
      %p47 = scmp.ne.s32.totalorder %s36, %s39
      %p48 = scmp.eq.s32.totalorder %s17, 1
      %p49 = por %p47, %p48
      %p50 = scmp.ne.s32.totalorder %s39, %s40
      %p51 = scmp.eq.s32.totalorder %s17, 0
      %p52 = por %p50, %p51
      %p53 = scmp.ne.s32.totalorder %s39, %s40
      %p54 = scmp.eq.s32.totalorder %s18, 1
      %p55 = por %p53, %p54
      %p57 = scmp.ne.s32.totalorder %s40, %s56
      %p58 = scmp.eq.s32.totalorder %s18, 0
      %p59 = por %p57, %p58
      %s60 = ssub.s32 %s19, %s31
      %s61 = ssub.s32 %s20, %s27
      %s62 = sor.u32 %s60, %s61
      %p63 = scmp.eq.s32.totalorder %s62, 0
      %s65 = sadd.s32 %s64, 1
      %s66 = scalar_select %p63, %s64, %s65
      %p69 = pneg %p63
      %p70 = scmp.eq.s32.totalorder %s12, 1
      %p71 = por %p69, %p70
      %p72 = scmp.ne.s32.totalorder %s64, %s67
      %p73 = scmp.eq.s32.totalorder %s12, 0
      %p74 = por %p72, %p73
      %p75 = scmp.ne.s32.totalorder %s64, %s67
      %p76 = scmp.eq.s32.totalorder %s17, 1
      %p77 = por %p75, %p76
      %p78 = scmp.ne.s32.totalorder %s67, %s68
      %p79 = scmp.eq.s32.totalorder %s17, 0
      %p80 = por %p78, %p79
      %p81 = scmp.ne.s32.totalorder %s67, %s68
      %p82 = scmp.eq.s32.totalorder %s18, 1
      %p83 = por %p81, %p82
      %p85 = scmp.ne.s32.totalorder %s68, %s84
      %p86 = scmp.eq.s32.totalorder %s18, 0
      %p87 = por %p85, %p86
      %s89 = sadd.s32 %s88, 1
      %p92 = scmp.eq.s32.totalorder %s12, 1
      %p93 = scmp.ne.s32.totalorder %s88, %s90
      %p94 = scmp.eq.s32.totalorder %s12, 0
      %p95 = por %p93, %p94
      %p96 = scmp.ne.s32.totalorder %s88, %s90
      %p97 = scmp.eq.s32.totalorder %s17, 1
      %p98 = por %p96, %p97
      %p99 = scmp.ne.s32.totalorder %s90, %s91
      %p100 = scmp.eq.s32.totalorder %s17, 0
      %p101 = por %p99, %p100
      %p102 = scmp.ne.s32.totalorder %s90, %s91
      %p103 = scmp.eq.s32.totalorder %s18, 1
      %p104 = por %p102, %p103
      %p106 = scmp.ne.s32.totalorder %s91, %s105
      %p107 = scmp.eq.s32.totalorder %s18, 0
      %p108 = por %p106, %p107
      %s110 = sadd.s32 %s109, 1
      %p113 = scmp.eq.s32.totalorder %s12, 1
      %p114 = scmp.ne.s32.totalorder %s109, %s111
      %p115 = scmp.eq.s32.totalorder %s12, 0
      %p116 = por %p114, %p115
      %p117 = scmp.ne.s32.totalorder %s109, %s111
      %p118 = scmp.eq.s32.totalorder %s17, 1
      %p119 = por %p117, %p118
      %p120 = scmp.ne.s32.totalorder %s111, %s112
      %p121 = scmp.eq.s32.totalorder %s17, 0
      %p122 = por %p120, %p121
      %p123 = scmp.ne.s32.totalorder %s111, %s112
      %p124 = scmp.eq.s32.totalorder %s18, 1
      %p125 = por %p123, %p124
      %p127 = scmp.ne.s32.totalorder %s112, %s126
      %p128 = scmp.eq.s32.totalorder %s18, 0
      %p129 = por %p127, %p128
      %s131 = sadd.s32 %s130, 1
      %p134 = scmp.eq.s32.totalorder %s12, 1
      %p135 = scmp.ne.s32.totalorder %s130, %s132
      %p136 = scmp.eq.s32.totalorder %s12, 0
      %p137 = por %p135, %p136
      %p138 = scmp.ne.s32.totalorder %s130, %s132
      %p139 = scmp.eq.s32.totalorder %s17, 1
      %p140 = por %p138, %p139
      %p141 = scmp.ne.s32.totalorder %s132, %s133
      %p142 = scmp.eq.s32.totalorder %s17, 0
      %p143 = por %p141, %p142
      %p144 = scmp.ne.s32.totalorder %s132, %s133
      %p145 = scmp.eq.s32.totalorder %s18, 1
      %p146 = por %p144, %p145
      %p148 = scmp.ne.s32.totalorder %s133, %s147
      %p149 = scmp.eq.s32.totalorder %s18, 0
      %p150 = por %p148, %p149
      %s151 = ssub.s32 %s19, %s31
      %s152 = ssub.s32 %s20, %s27
      %s153 = sor.u32 %s151, %s152
      %p154 = scmp.eq.s32.totalorder %s153, 0
      %s156 = sadd.s32 %s155, 1
      %s157 = scalar_select %p154, %s155, %s156
      %p160 = pneg %p154
      %p161 = scmp.eq.s32.totalorder %s12, 1
      %p162 = por %p160, %p161
      %p163 = scmp.ne.s32.totalorder %s155, %s158
      %p164 = scmp.eq.s32.totalorder %s12, 0
      %p165 = por %p163, %p164
      %p166 = scmp.ne.s32.totalorder %s155, %s158
      %p167 = scmp.eq.s32.totalorder %s17, 1
      %p168 = por %p166, %p167
      %p169 = scmp.ne.s32.totalorder %s158, %s159
      %p170 = scmp.eq.s32.totalorder %s17, 0
      %p171 = por %p169, %p170
      %p172 = scmp.ne.s32.totalorder %s158, %s159
      %p173 = scmp.eq.s32.totalorder %s18, 1
      %p174 = por %p172, %p173
      %p176 = scmp.ne.s32.totalorder %s159, %s175
      %p177 = scmp.eq.s32.totalorder %s18, 0
      %p178 = por %p176, %p177
      %p179 = scmp.le.s32.totalorder 1, %s12
      %p180 = scmp.lt.s32.totalorder %s12, 3
      %p181 = pnand %p179, %p180
      %p182 = pneg %p181
      // Predicated region
      $region9: #{repatch_pallas.1} parent=5 // pred_check
        _
      $region10: #{repatch_pallas.1} parent=5 // pred_check_branch
        %184 = sbr.rel (%p181) target = $region12
      $region11: #{repatch_pallas.1} parent=5 // pred_region
        %s185 = ssub.s32 %s12, 1
        // Predicated region
        $region13: #{repatch_pallas.1} parent=11 // pred_check
          %p186 = pneg %p101
        $region14: #{repatch_pallas.1} parent=11 // pred_check_branch
          %188 = sbr.rel (%p186) target = $region16
        $region15: #{repatch_pallas.1} parent=11 // pred_region
          _
        $region16: #{repatch_pallas.1} parent=11 // pred_fallthru
          _
        // Predicated region
        $region17: #{repatch_pallas.1} parent=11 // pred_check
          %p189 = pneg %p122
        $region18: #{repatch_pallas.1} parent=11 // pred_check_branch
          %191 = sbr.rel (%p189) target = $region20
        $region19: #{repatch_pallas.1} parent=11 // pred_region
          _
        $region20: #{repatch_pallas.1} parent=11 // pred_fallthru
          _
        // Predicated region
        $region21: #{repatch_pallas.1} parent=11 // pred_check
          %p192 = pneg %p143
        $region22: #{repatch_pallas.1} parent=11 // pred_check_branch
          %194 = sbr.rel (%p192) target = $region24
        $region23: #{repatch_pallas.1} parent=11 // pred_region
          %s196 = ssub.s32 16, 16
          %197 = vsyncadd [#allocation3], %s196
          %s199 = sshll.u32 %s4, 4
          %s200 = int_to_ptr.vmem [resolvable:$true] %s199
          %202 = dma.vmem_to_smem %s200, 16, [#allocation2], [#allocation3]
        $region24: #{repatch_pallas.1} parent=11 // pred_fallthru
          _
      $region12: #{repatch_pallas.1} parent=5 // pred_fallthru
        _
      %p203 = scmp.lt.s32.totalorder %s12, 2
      // Predicated region
      $region25: #{repatch_pallas.1} parent=5 // pred_check
        %p204 = pneg %p203
      $region26: #{repatch_pallas.1} parent=5 // pred_check_branch
        %206 = sbr.rel (%p204) target = $region28
      $region27: #{repatch_pallas.1} parent=5 // pred_region
        // Predicated region
        $region29: #{repatch_pallas.1} parent=27 // pred_check
          %p207 = pneg %p46
        $region30: #{repatch_pallas.1} parent=27 // pred_check_branch
          %209 = sbr.rel (%p207) target = $region32
        $region31: #{repatch_pallas.1} parent=27 // pred_region
          %s210 = smul.u32 2, %s20
          %p211 = scmp.lt.s32.totalorder %s19, 1
          %s212 = scalar_select %p211, %s19, 1
          %p213 = scmp.lt.s32.totalorder %s210, 1
          %s214 = scalar_select %p213, %s210, 1
          %s215 = smul.addr %s212, 8
          %s216 = sadd.s32 %s214, %s215
          %s217 = smul.addr %s216, 8
          %s218 = scalar_lea.vmem %s0, %s217
          %s219 = smul.u32 2, %s20
        $region32: #{repatch_pallas.1} parent=27 // pred_fallthru
          _
        // Predicated region
        $region33: #{repatch_pallas.1} parent=27 // pred_check
          %p220 = pneg %p74
        $region34: #{repatch_pallas.1} parent=27 // pred_check_branch
          %222 = sbr.rel (%p220) target = $region36
        $region35: #{repatch_pallas.1} parent=27 // pred_region
          %s223 = smul.u32 2, %s20
          %p224 = scmp.lt.s32.totalorder %s19, 1
          %s225 = scalar_select %p224, %s19, 1
          %p226 = scmp.lt.s32.totalorder %s223, 1
          %s227 = scalar_select %p226, %s223, 1
          %s228 = smul.addr %s225, 8
          %s229 = sadd.s32 %s227, %s228
          %s230 = smul.addr %s229, 8
          %s231 = scalar_lea.vmem %s1, %s230
          %s232 = smul.u32 2, %s20
        $region36: #{repatch_pallas.1} parent=27 // pred_fallthru
          _
      $region28: #{repatch_pallas.1} parent=5 // pred_fallthru
        _
      %p233 = scmp.le.s32.totalorder 1, %s12
      %p234 = scmp.lt.s32.totalorder %s12, 3
      %p235 = pnand %p233, %p234
      %p236 = pneg %p235
      // Predicated region
      $region37: #{repatch_pallas.1} parent=5 // pred_check
        _
      $region38: #{repatch_pallas.1} parent=5 // pred_check_branch
        %238 = sbr.rel (%p235) target = $region40
      $region39: #{repatch_pallas.1} parent=5 // pred_region
        %s239 = ssub.s32 %s12, 1
        // Predicated region
        $region41: #{repatch_pallas.1} parent=39 // pred_check
          %p240 = pneg %p143
        $region42: #{repatch_pallas.1} parent=39 // pred_check_branch
          %242 = sbr.rel (%p240) target = $region44
        $region43: #{repatch_pallas.1} parent=39 // pred_region
          %243 = dma.done [#allocation3], 16
        $region44: #{repatch_pallas.1} parent=39 // pred_fallthru
          _
        %244 = sfence
        %s245 = smul.u32 2, %s22
        %p246 = scmp.lt.s32.totalorder %s21, 1
        %s247 = scalar_select %p246, %s21, 1
        %p248 = scmp.lt.s32.totalorder %s245, 1
        %s249 = scalar_select %p248, %s245, 1
        %s250 = smul.addr %s247, 8
        %s251 = sadd.s32 %s249, %s250
        %s252 = smul.addr %s251, 8
        %s253 = scalar_lea.vmem %s0, %s252
        %p254 = pneg %p52
        %p255 = pneg %p49
        %s256 = smul.u32 2, %s22
        %p257 = scmp.lt.s32.totalorder %s21, 1
        %s258 = scalar_select %p257, %s21, 1
        %p259 = scmp.lt.s32.totalorder %s256, 1
        %s260 = scalar_select %p259, %s256, 1
        %s261 = smul.addr %s258, 8
        %s262 = sadd.s32 %s260, %s261
        %s263 = smul.addr %s262, 8
        %s264 = scalar_lea.vmem %s1, %s263
        %p265 = pneg %p80
        %p266 = pneg %p77
        %p267 = pneg %p101
        %p268 = pneg %p98
        %p269 = pneg %p122
        %p270 = pneg %p119
        %p271 = pneg %p143
        %p272 = pneg %p140
        %p273 = pneg %p171
        %p274 = pneg %p168
        %s275 = smul.u32 2, %s22
        %p276 = scmp.lt.s32.totalorder %s21, 1
        %s277 = scalar_select %p276, %s21, 1
        %p278 = scmp.lt.s32.totalorder %s275, 1
        %s279 = scalar_select %p278, %s275, 1
        %s280 = smul.addr %s279, 2
        %s281 = smul.addr %s277, 8
        %s282 = sadd.s32 %s280, %s281
        %s283 = smul.addr %s282, 8
        %s284 = scalar_lea.vmem %s5, %s283
        %s285 = smul.u32 2, %s22
        %p286 = scmp.lt.s32.totalorder %s21, 1
        %s287 = scalar_select %p286, %s21, 1
        %p288 = scmp.lt.s32.totalorder %s285, 1
        %s289 = scalar_select %p288, %s285, 1
        %s290 = smul.addr %s287, 8
        %s291 = sadd.s32 %s289, %s290
        %s292 = smul.addr %s291, 8
        %s293 = scalar_lea.vmem %s0, %s292
        %s294 = smul.u32 2, %s22
        %s295 = smul.u32 2, %s22
        %p296 = scmp.lt.s32.totalorder %s21, 1
        %s297 = scalar_select %p296, %s21, 1
        %p298 = scmp.lt.s32.totalorder %s295, 1
        %s299 = scalar_select %p298, %s295, 1
        %s300 = smul.addr %s297, 8
        %s301 = sadd.s32 %s299, %s300
        %s302 = smul.addr %s301, 8
        %s303 = scalar_lea.vmem %s1, %s302
        %s304 = smul.u32 2, %s22
        %s305 = smul.u32 2, %s22
        %p306 = scmp.lt.s32.totalorder %s21, 1
        %s307 = scalar_select %p306, %s21, 1
        %p308 = scmp.lt.s32.totalorder %s305, 1
        %s309 = scalar_select %p308, %s305, 1
        %s310 = smul.addr %s309, 2
        %s311 = smul.addr %s307, 8
        %s312 = sadd.s32 %s310, %s311
        %s313 = smul.addr %s312, 8
        %s314 = scalar_lea.vmem %s5, %s313
        %s315 = smul.u32 2, %s22
        %s316 = sld [smem:[#allocation2]]
        %s317 = sld [smem:[#allocation2 + $0x1]]
        %v318 = vld [vmem:[%s293] sm:$0xff]
        %v319 = vld [vmem:[%s293 + $0x8] sm:$0xff]
        %v320 = vld [vmem:[%s2] sm:$0xff]
        %v321 = vld [vmem:[%s2 + $0x8] sm:$0xff]
        %v322 = vld [vmem:[%s2 + $0x10] sm:$0xff]
        %v323 = vld [vmem:[%s2 + $0x18] sm:$0xff]
        %s324 = scalar_lea.vmem %s293, 16
        %v325 = vld [vmem:[%s324] sm:$0xff]
        %v326 = vld [vmem:[%s324 + $0x8] sm:$0xff]
        %s327 = scalar_lea.vmem %s2, 32
        %v328 = vld [vmem:[%s327] sm:$0xff]
        %v329 = vld [vmem:[%s327 + $0x8] sm:$0xff]
        %v330 = vld [vmem:[%s327 + $0x10] sm:$0xff]
        %v331 = vld [vmem:[%s327 + $0x18] sm:$0xff]
        %vm332 = vcmask 130048
        %v334 = vsel %vm332, %v325, 0
        %v337 = vsel %vm332, %v326, 0
        %339 = vmatprep.subr.mxu0 0.0
        %340 = vmatpush1.msra.mxu0 0.0
        %341 = vmatprep.subr.mxu0 0.0
        %342 = vmatpush1.msra.mxu0 0.0
        %343 = vmatprep.subr.mxu0 0.0
        %344 = vmatpush1.msra.mxu0 0.0
        %345 = vmatprep.subr.mxu0 0.0
        %346 = vmatpush1.msra.mxu0 0.0
        %347 = vmatprep.subr.mxu0 0.0
        %348 = vmatpush1.msra.mxu0 0.0
        %349 = vmatprep.subr.mxu0 0.0
        %350 = vmatpush1.msra.mxu0 0.0
        %351 = vmatprep.subr.mxu0 0.0
        %352 = vmatpush1.msra.mxu0 0.0
        %353 = vmatprep.subr.mxu0 0.0
        %354 = vmatpush1.msra.mxu0 0.0
        %355 = vmatprep.subr.mxu0 0.0
        %356 = vmatpush1.msra.mxu0 0.0
        %357 = vmatprep.subr.mxu0 0.0
        %358 = vmatpush1.msra.mxu0 0.0
        %359 = vmatprep.subr.mxu0 0.0
        %360 = vmatpush1.msra.mxu0 0.0
        %361 = vmatprep.subr.mxu0 0.0
        %362 = vmatpush1.msra.mxu0 0.0
        %363 = vmatprep.subr.mxu0 0.0
        %364 = vmatpush1.msra.mxu0 0.0
        %365 = vmatprep.subr.mxu0 0.0
        %366 = vmatpush1.msra.mxu0 0.0
        %367 = vmatprep.subr.mxu0 %v331
        %368 = vmatpush1.msra.mxu0 %v330
        %369 = vmatprep.subr.mxu0 %v329
        %370 = vmatpush1.msra.mxu0 %v328
        %371 = vmatprep.subr.mxu0 0.0
        %372 = vmatpush2.msra.mxu0 0.0
        %373 = vmatprep.subr.mxu0 0.0
        %374 = vmatpush2.msra.mxu0 0.0
        %375 = vmatprep.subr.mxu0 0.0
        %376 = vmatpush2.msra.mxu0 0.0
        %377 = vmatprep.subr.mxu0 0.0
        %378 = vmatpush2.msra.mxu0 0.0
        %379 = vmatprep.subr.mxu0 0.0
        %380 = vmatpush2.msra.mxu0 0.0
        %381 = vmatprep.subr.mxu0 0.0
        %382 = vmatpush2.msra.mxu0 0.0
        %383 = vmatprep.subr.mxu0 0.0
        %384 = vmatpush2.msra.mxu0 0.0
        %385 = vmatprep.subr.mxu0 0.0
        %386 = vmatpush2.msra.mxu0 0.0
        %387 = vmatprep.subr.mxu0 0.0
        %388 = vmatpush2.msra.mxu0 0.0
        %389 = vmatprep.subr.mxu0 0.0
        %390 = vmatpush2.msra.mxu0 0.0
        %391 = vmatprep.subr.mxu0 0.0
        %392 = vmatpush2.msra.mxu0 0.0
        %393 = vmatprep.subr.mxu0 0.0
        %394 = vmatpush2.msra.mxu0 0.0
        %395 = vmatprep.subr.mxu0 0.0
        %396 = vmatpush2.msra.mxu0 0.0
        %397 = vmatprep.subr.mxu0 0.0
        %398 = vmatpush2.msra.mxu0 0.0
        %399 = vmatprep.subr.mxu0 0.0
        %400 = vmatpush2.msra.mxu0 0.0
        %401 = vmatprep.subr.mxu0 0.0
        %402 = vmatpush2.msra.mxu0 0.0
        %403 = vmatprep.mubr.f32.mxu0 0.0
        %404 = vmatmul.mubr.f32.gmra.mxu0 %v334
        %v405 = vpop.f32.mrf.mxu0
        %v406 = vadd.f32 0.0, %v405
        %v407 = vpop.f32.mrf.mxu0
        %v408 = vadd.f32 0.0, %v407
        %409 = vmatprep.mubr.f32.mxu0 0.0
        %410 = vmatmul.mubr.f32.gmra.mxu0 %v337
        %v411 = vpop.f32.mrf.mxu0
        %v412 = vadd.f32 0.0, %v411
        %v413 = vpop.f32.mrf.mxu0
        %v414 = vadd.f32 0.0, %v413
        %415 = vdwg.mxu0
        %v417 = vsel %vm332, %v318, 0
        %v420 = vsel %vm332, %v319, 0
        %422 = vmatprep.subr.mxu0 0.0
        %423 = vmatpush1.msra.mxu0 0.0
        %424 = vmatprep.subr.mxu0 0.0
        %425 = vmatpush1.msra.mxu0 0.0
        %426 = vmatprep.subr.mxu0 0.0
        %427 = vmatpush1.msra.mxu0 0.0
        %428 = vmatprep.subr.mxu0 0.0
        %429 = vmatpush1.msra.mxu0 0.0
        %430 = vmatprep.subr.mxu0 0.0
        %431 = vmatpush1.msra.mxu0 0.0
        %432 = vmatprep.subr.mxu0 0.0
        %433 = vmatpush1.msra.mxu0 0.0
        %434 = vmatprep.subr.mxu0 0.0
        %435 = vmatpush1.msra.mxu0 0.0
        %436 = vmatprep.subr.mxu0 0.0
        %437 = vmatpush1.msra.mxu0 0.0
        %438 = vmatprep.subr.mxu0 0.0
        %439 = vmatpush1.msra.mxu0 0.0
        %440 = vmatprep.subr.mxu0 0.0
        %441 = vmatpush1.msra.mxu0 0.0
        %442 = vmatprep.subr.mxu0 0.0
        %443 = vmatpush1.msra.mxu0 0.0
        %444 = vmatprep.subr.mxu0 0.0
        %445 = vmatpush1.msra.mxu0 0.0
        %446 = vmatprep.subr.mxu0 0.0
        %447 = vmatpush1.msra.mxu0 0.0
        %448 = vmatprep.subr.mxu0 0.0
        %449 = vmatpush1.msra.mxu0 0.0
        %450 = vmatprep.subr.mxu0 %v323
        %451 = vmatpush1.msra.mxu0 %v322
        %452 = vmatprep.subr.mxu0 %v321
        %453 = vmatpush1.msra.mxu0 %v320
        %454 = vmatprep.subr.mxu0 0.0
        %455 = vmatpush2.msra.mxu0 0.0
        %456 = vmatprep.subr.mxu0 0.0
        %457 = vmatpush2.msra.mxu0 0.0
        %458 = vmatprep.subr.mxu0 0.0
        %459 = vmatpush2.msra.mxu0 0.0
        %460 = vmatprep.subr.mxu0 0.0
        %461 = vmatpush2.msra.mxu0 0.0
        %462 = vmatprep.subr.mxu0 0.0
        %463 = vmatpush2.msra.mxu0 0.0
        %464 = vmatprep.subr.mxu0 0.0
        %465 = vmatpush2.msra.mxu0 0.0
        %466 = vmatprep.subr.mxu0 0.0
        %467 = vmatpush2.msra.mxu0 0.0
        %468 = vmatprep.subr.mxu0 0.0
        %469 = vmatpush2.msra.mxu0 0.0
        %470 = vmatprep.subr.mxu0 0.0
        %471 = vmatpush2.msra.mxu0 0.0
        %472 = vmatprep.subr.mxu0 0.0
        %473 = vmatpush2.msra.mxu0 0.0
        %474 = vmatprep.subr.mxu0 0.0
        %475 = vmatpush2.msra.mxu0 0.0
        %476 = vmatprep.subr.mxu0 0.0
        %477 = vmatpush2.msra.mxu0 0.0
        %478 = vmatprep.subr.mxu0 0.0
        %479 = vmatpush2.msra.mxu0 0.0
        %480 = vmatprep.subr.mxu0 0.0
        %481 = vmatpush2.msra.mxu0 0.0
        %482 = vmatprep.subr.mxu0 0.0
        %483 = vmatpush2.msra.mxu0 0.0
        %484 = vmatprep.subr.mxu0 0.0
        %485 = vmatpush2.msra.mxu0 0.0
        %486 = vmatprep.mubr.f32.mxu0 0.0
        %487 = vmatmul.mubr.f32.gmra.mxu0 %v417
        %v488 = vpop.f32.mrf.mxu0
        %v489 = vadd.f32 %v406, %v488
        %v490 = vpop.f32.mrf.mxu0
        %v491 = vadd.f32 %v408, %v490
        %492 = vmatprep.mubr.f32.mxu0 0.0
        %493 = vmatmul.mubr.f32.gmra.mxu0 %v420
        %v494 = vpop.f32.mrf.mxu0
        %v495 = vadd.f32 %v412, %v494
        %v496 = vpop.f32.mrf.mxu0
        %v497 = vadd.f32 %v414, %v496
        %498 = vdwg.mxu0
        %s499 = scalar_lea.vmem %s293, 32
        %v500 = vld [vmem:[%s499] sm:$0xff]
        %v501 = vld [vmem:[%s499 + $0x8] sm:$0xff]
        %s502 = scalar_lea.vmem %s2, 64
        %v503 = vld [vmem:[%s502] sm:$0xff]
        %v504 = vld [vmem:[%s502 + $0x8] sm:$0xff]
        %v505 = vld [vmem:[%s502 + $0x10] sm:$0xff]
        %v506 = vld [vmem:[%s502 + $0x18] sm:$0xff]
        %v508 = vsel %vm332, %v500, 0
        %v511 = vsel %vm332, %v501, 0
        %513 = vmatprep.subr.mxu0 0.0
        %514 = vmatpush1.msra.mxu0 0.0
        %515 = vmatprep.subr.mxu0 0.0
        %516 = vmatpush1.msra.mxu0 0.0
        %517 = vmatprep.subr.mxu0 0.0
        %518 = vmatpush1.msra.mxu0 0.0
        %519 = vmatprep.subr.mxu0 0.0
        %520 = vmatpush1.msra.mxu0 0.0
        %521 = vmatprep.subr.mxu0 0.0
        %522 = vmatpush1.msra.mxu0 0.0
        %523 = vmatprep.subr.mxu0 0.0
        %524 = vmatpush1.msra.mxu0 0.0
        %525 = vmatprep.subr.mxu0 0.0
        %526 = vmatpush1.msra.mxu0 0.0
        %527 = vmatprep.subr.mxu0 0.0
        %528 = vmatpush1.msra.mxu0 0.0
        %529 = vmatprep.subr.mxu0 0.0
        %530 = vmatpush1.msra.mxu0 0.0
        %531 = vmatprep.subr.mxu0 0.0
        %532 = vmatpush1.msra.mxu0 0.0
        %533 = vmatprep.subr.mxu0 0.0
        %534 = vmatpush1.msra.mxu0 0.0
        %535 = vmatprep.subr.mxu0 0.0
        %536 = vmatpush1.msra.mxu0 0.0
        %537 = vmatprep.subr.mxu0 0.0
        %538 = vmatpush1.msra.mxu0 0.0
        %539 = vmatprep.subr.mxu0 0.0
        %540 = vmatpush1.msra.mxu0 0.0
        %541 = vmatprep.subr.mxu0 %v506
        %542 = vmatpush1.msra.mxu0 %v505
        %543 = vmatprep.subr.mxu0 %v504
        %544 = vmatpush1.msra.mxu0 %v503
        %545 = vmatprep.subr.mxu0 0.0
        %546 = vmatpush2.msra.mxu0 0.0
        %547 = vmatprep.subr.mxu0 0.0
        %548 = vmatpush2.msra.mxu0 0.0
        %549 = vmatprep.subr.mxu0 0.0
        %550 = vmatpush2.msra.mxu0 0.0
        %551 = vmatprep.subr.mxu0 0.0
        %552 = vmatpush2.msra.mxu0 0.0
        %553 = vmatprep.subr.mxu0 0.0
        %554 = vmatpush2.msra.mxu0 0.0
        %555 = vmatprep.subr.mxu0 0.0
        %556 = vmatpush2.msra.mxu0 0.0
        %557 = vmatprep.subr.mxu0 0.0
        %558 = vmatpush2.msra.mxu0 0.0
        %559 = vmatprep.subr.mxu0 0.0
        %560 = vmatpush2.msra.mxu0 0.0
        %561 = vmatprep.subr.mxu0 0.0
        %562 = vmatpush2.msra.mxu0 0.0
        %563 = vmatprep.subr.mxu0 0.0
        %564 = vmatpush2.msra.mxu0 0.0
        %565 = vmatprep.subr.mxu0 0.0
        %566 = vmatpush2.msra.mxu0 0.0
        %567 = vmatprep.subr.mxu0 0.0
        %568 = vmatpush2.msra.mxu0 0.0
        %569 = vmatprep.subr.mxu0 0.0
        %570 = vmatpush2.msra.mxu0 0.0
        %571 = vmatprep.subr.mxu0 0.0
        %572 = vmatpush2.msra.mxu0 0.0
        %573 = vmatprep.subr.mxu0 0.0
        %574 = vmatpush2.msra.mxu0 0.0
        %575 = vmatprep.subr.mxu0 0.0
        %576 = vmatpush2.msra.mxu0 0.0
        %577 = vmatprep.mubr.f32.mxu0 0.0
        %578 = vmatmul.mubr.f32.gmra.mxu0 %v508
        %v579 = vpop.f32.mrf.mxu0
        %v580 = vadd.f32 0.0, %v579
        %v581 = vpop.f32.mrf.mxu0
        %v582 = vadd.f32 0.0, %v581
        %583 = vmatprep.mubr.f32.mxu0 0.0
        %584 = vmatmul.mubr.f32.gmra.mxu0 %v511
        %v585 = vpop.f32.mrf.mxu0
        %v586 = vadd.f32 0.0, %v585
        %v587 = vpop.f32.mrf.mxu0
        %v588 = vadd.f32 0.0, %v587
        %589 = vdwg.mxu0
        %v590 = vadd.f32 %v489, %v580
        %v591 = vadd.f32 %v491, %v582
        %v592 = vadd.f32 %v495, %v586
        %v593 = vadd.f32 %v497, %v588
        %s594 = scalar_lea.vmem %s293, 48
        %v595 = vld [vmem:[%s594] sm:$0xff]
        %v596 = vld [vmem:[%s594 + $0x8] sm:$0xff]
        %s597 = scalar_lea.vmem %s2, 96
        %v598 = vld [vmem:[%s597] sm:$0xff]
        %v599 = vld [vmem:[%s597 + $0x8] sm:$0xff]
        %v600 = vld [vmem:[%s597 + $0x10] sm:$0xff]
        %v601 = vld [vmem:[%s597 + $0x18] sm:$0xff]
        %v603 = vsel %vm332, %v595, 0
        %v606 = vsel %vm332, %v596, 0
        %608 = vmatprep.subr.mxu0 0.0
        %609 = vmatpush1.msra.mxu0 0.0
        %610 = vmatprep.subr.mxu0 0.0
        %611 = vmatpush1.msra.mxu0 0.0
        %612 = vmatprep.subr.mxu0 0.0
        %613 = vmatpush1.msra.mxu0 0.0
        %614 = vmatprep.subr.mxu0 0.0
        %615 = vmatpush1.msra.mxu0 0.0
        %616 = vmatprep.subr.mxu0 0.0
        %617 = vmatpush1.msra.mxu0 0.0
        %618 = vmatprep.subr.mxu0 0.0
        %619 = vmatpush1.msra.mxu0 0.0
        %620 = vmatprep.subr.mxu0 0.0
        %621 = vmatpush1.msra.mxu0 0.0
        %622 = vmatprep.subr.mxu0 0.0
        %623 = vmatpush1.msra.mxu0 0.0
        %624 = vmatprep.subr.mxu0 0.0
        %625 = vmatpush1.msra.mxu0 0.0
        %626 = vmatprep.subr.mxu0 0.0
        %627 = vmatpush1.msra.mxu0 0.0
        %628 = vmatprep.subr.mxu0 0.0
        %629 = vmatpush1.msra.mxu0 0.0
        %630 = vmatprep.subr.mxu0 0.0
        %631 = vmatpush1.msra.mxu0 0.0
        %632 = vmatprep.subr.mxu0 0.0
        %633 = vmatpush1.msra.mxu0 0.0
        %634 = vmatprep.subr.mxu0 0.0
        %635 = vmatpush1.msra.mxu0 0.0
        %636 = vmatprep.subr.mxu0 %v601
        %637 = vmatpush1.msra.mxu0 %v600
        %638 = vmatprep.subr.mxu0 %v599
        %639 = vmatpush1.msra.mxu0 %v598
        %640 = vmatprep.subr.mxu0 0.0
        %641 = vmatpush2.msra.mxu0 0.0
        %642 = vmatprep.subr.mxu0 0.0
        %643 = vmatpush2.msra.mxu0 0.0
        %644 = vmatprep.subr.mxu0 0.0
        %645 = vmatpush2.msra.mxu0 0.0
        %646 = vmatprep.subr.mxu0 0.0
        %647 = vmatpush2.msra.mxu0 0.0
        %648 = vmatprep.subr.mxu0 0.0
        %649 = vmatpush2.msra.mxu0 0.0
        %650 = vmatprep.subr.mxu0 0.0
        %651 = vmatpush2.msra.mxu0 0.0
        %652 = vmatprep.subr.mxu0 0.0
        %653 = vmatpush2.msra.mxu0 0.0
        %654 = vmatprep.subr.mxu0 0.0
        %655 = vmatpush2.msra.mxu0 0.0
        %656 = vmatprep.subr.mxu0 0.0
        %657 = vmatpush2.msra.mxu0 0.0
        %658 = vmatprep.subr.mxu0 0.0
        %659 = vmatpush2.msra.mxu0 0.0
        %660 = vmatprep.subr.mxu0 0.0
        %661 = vmatpush2.msra.mxu0 0.0
        %662 = vmatprep.subr.mxu0 0.0
        %663 = vmatpush2.msra.mxu0 0.0
        %664 = vmatprep.subr.mxu0 0.0
        %665 = vmatpush2.msra.mxu0 0.0
        %666 = vmatprep.subr.mxu0 0.0
        %667 = vmatpush2.msra.mxu0 0.0
        %668 = vmatprep.subr.mxu0 0.0
        %669 = vmatpush2.msra.mxu0 0.0
        %670 = vmatprep.subr.mxu0 0.0
        %671 = vmatpush2.msra.mxu0 0.0
        %672 = vmatprep.mubr.f32.mxu0 0.0
        %673 = vmatmul.mubr.f32.gmra.mxu0 %v603
        %v674 = vpop.f32.mrf.mxu0
        %v675 = vadd.f32 0.0, %v674
        %v676 = vpop.f32.mrf.mxu0
        %v677 = vadd.f32 0.0, %v676
        %678 = vmatprep.mubr.f32.mxu0 0.0
        %679 = vmatmul.mubr.f32.gmra.mxu0 %v606
        %v680 = vpop.f32.mrf.mxu0
        %v681 = vadd.f32 0.0, %v680
        %v682 = vpop.f32.mrf.mxu0
        %v683 = vadd.f32 0.0, %v682
        %684 = vdwg.mxu0
        %v685 = vadd.f32 %v590, %v675
        %v686 = vadd.f32 %v591, %v677
        %v687 = vadd.f32 %v592, %v681
        %v688 = vadd.f32 %v593, %v683
        %v689 = vstv %s316
        %v690 = vadd.f32 %v685, %v689
        %v691 = vadd.f32 %v686, %v689
        %v692 = vadd.f32 %v687, %v689
        %v693 = vadd.f32 %v688, %v689
        %v694 = vld [vmem:[%s3] sm:$0xff]
        %v695 = vld [vmem:[%s3 + $0x8] sm:$0xff]
        %v696 = vld [vmem:[%s3 + $0x10] sm:$0xff]
        %v697 = vld [vmem:[%s3 + $0x18] sm:$0xff]
        %s698 = scalar_lea.vmem %s3, 32
        %v699 = vld [vmem:[%s698] sm:$0xff]
        %v700 = vld [vmem:[%s698 + $0x8] sm:$0xff]
        %v701 = vld [vmem:[%s698 + $0x10] sm:$0xff]
        %v702 = vld [vmem:[%s698 + $0x18] sm:$0xff]
        %703 = vmatprep.subr.mxu0 0.0
        %704 = vmatpush1.msra.mxu0 0.0
        %705 = vmatprep.subr.mxu0 0.0
        %706 = vmatpush1.msra.mxu0 0.0
        %707 = vmatprep.subr.mxu0 0.0
        %708 = vmatpush1.msra.mxu0 0.0
        %709 = vmatprep.subr.mxu0 0.0
        %710 = vmatpush1.msra.mxu0 0.0
        %711 = vmatprep.subr.mxu0 0.0
        %712 = vmatpush1.msra.mxu0 0.0
        %713 = vmatprep.subr.mxu0 0.0
        %714 = vmatpush1.msra.mxu0 0.0
        %715 = vmatprep.subr.mxu0 0.0
        %716 = vmatpush1.msra.mxu0 0.0
        %717 = vmatprep.subr.mxu0 0.0
        %718 = vmatpush1.msra.mxu0 0.0
        %719 = vmatprep.subr.mxu0 0.0
        %720 = vmatpush1.msra.mxu0 0.0
        %721 = vmatprep.subr.mxu0 0.0
        %722 = vmatpush1.msra.mxu0 0.0
        %723 = vmatprep.subr.mxu0 0.0
        %724 = vmatpush1.msra.mxu0 0.0
        %725 = vmatprep.subr.mxu0 0.0
        %726 = vmatpush1.msra.mxu0 0.0
        %727 = vmatprep.subr.mxu0 0.0
        %728 = vmatpush1.msra.mxu0 0.0
        %729 = vmatprep.subr.mxu0 0.0
        %730 = vmatpush1.msra.mxu0 0.0
        %731 = vmatprep.subr.mxu0 %v702
        %732 = vmatpush1.msra.mxu0 %v701
        %733 = vmatprep.subr.mxu0 %v700
        %734 = vmatpush1.msra.mxu0 %v699
        %735 = vmatprep.subr.mxu0 0.0
        %736 = vmatpush2.msra.mxu0 0.0
        %737 = vmatprep.subr.mxu0 0.0
        %738 = vmatpush2.msra.mxu0 0.0
        %739 = vmatprep.subr.mxu0 0.0
        %740 = vmatpush2.msra.mxu0 0.0
        %741 = vmatprep.subr.mxu0 0.0
        %742 = vmatpush2.msra.mxu0 0.0
        %743 = vmatprep.subr.mxu0 0.0
        %744 = vmatpush2.msra.mxu0 0.0
        %745 = vmatprep.subr.mxu0 0.0
        %746 = vmatpush2.msra.mxu0 0.0
        %747 = vmatprep.subr.mxu0 0.0
        %748 = vmatpush2.msra.mxu0 0.0
        %749 = vmatprep.subr.mxu0 0.0
        %750 = vmatpush2.msra.mxu0 0.0
        %751 = vmatprep.subr.mxu0 0.0
        %752 = vmatpush2.msra.mxu0 0.0
        %753 = vmatprep.subr.mxu0 0.0
        %754 = vmatpush2.msra.mxu0 0.0
        %755 = vmatprep.subr.mxu0 0.0
        %756 = vmatpush2.msra.mxu0 0.0
        %757 = vmatprep.subr.mxu0 0.0
        %758 = vmatpush2.msra.mxu0 0.0
        %759 = vmatprep.subr.mxu0 0.0
        %760 = vmatpush2.msra.mxu0 0.0
        %761 = vmatprep.subr.mxu0 0.0
        %762 = vmatpush2.msra.mxu0 0.0
        %763 = vmatprep.subr.mxu0 0.0
        %764 = vmatpush2.msra.mxu0 0.0
        %765 = vmatprep.subr.mxu0 0.0
        %766 = vmatpush2.msra.mxu0 0.0
        %767 = vmatprep.mubr.f32.mxu0 0.0
        %768 = vmatmul.mubr.f32.gmra.mxu0 %v334
        %v769 = vpop.f32.mrf.mxu0
        %v770 = vadd.f32 0.0, %v769
        %v771 = vpop.f32.mrf.mxu0
        %v772 = vadd.f32 0.0, %v771
        %773 = vmatprep.mubr.f32.mxu0 0.0
        %774 = vmatmul.mubr.f32.gmra.mxu0 %v337
        %v775 = vpop.f32.mrf.mxu0
        %v776 = vadd.f32 0.0, %v775
        %v777 = vpop.f32.mrf.mxu0
        %v778 = vadd.f32 0.0, %v777
        %779 = vdwg.mxu0
        %780 = vmatprep.subr.mxu0 0.0
        %781 = vmatpush1.msra.mxu0 0.0
        %782 = vmatprep.subr.mxu0 0.0
        %783 = vmatpush1.msra.mxu0 0.0
        %784 = vmatprep.subr.mxu0 0.0
        %785 = vmatpush1.msra.mxu0 0.0
        %786 = vmatprep.subr.mxu0 0.0
        %787 = vmatpush1.msra.mxu0 0.0
        %788 = vmatprep.subr.mxu0 0.0
        %789 = vmatpush1.msra.mxu0 0.0
        %790 = vmatprep.subr.mxu0 0.0
        %791 = vmatpush1.msra.mxu0 0.0
        %792 = vmatprep.subr.mxu0 0.0
        %793 = vmatpush1.msra.mxu0 0.0
        %794 = vmatprep.subr.mxu0 0.0
        %795 = vmatpush1.msra.mxu0 0.0
        %796 = vmatprep.subr.mxu0 0.0
        %797 = vmatpush1.msra.mxu0 0.0
        %798 = vmatprep.subr.mxu0 0.0
        %799 = vmatpush1.msra.mxu0 0.0
        %800 = vmatprep.subr.mxu0 0.0
        %801 = vmatpush1.msra.mxu0 0.0
        %802 = vmatprep.subr.mxu0 0.0
        %803 = vmatpush1.msra.mxu0 0.0
        %804 = vmatprep.subr.mxu0 0.0
        %805 = vmatpush1.msra.mxu0 0.0
        %806 = vmatprep.subr.mxu0 0.0
        %807 = vmatpush1.msra.mxu0 0.0
        %808 = vmatprep.subr.mxu0 %v697
        %809 = vmatpush1.msra.mxu0 %v696
        %810 = vmatprep.subr.mxu0 %v695
        %811 = vmatpush1.msra.mxu0 %v694
        %812 = vmatprep.subr.mxu0 0.0
        %813 = vmatpush2.msra.mxu0 0.0
        %814 = vmatprep.subr.mxu0 0.0
        %815 = vmatpush2.msra.mxu0 0.0
        %816 = vmatprep.subr.mxu0 0.0
        %817 = vmatpush2.msra.mxu0 0.0
        %818 = vmatprep.subr.mxu0 0.0
        %819 = vmatpush2.msra.mxu0 0.0
        %820 = vmatprep.subr.mxu0 0.0
        %821 = vmatpush2.msra.mxu0 0.0
        %822 = vmatprep.subr.mxu0 0.0
        %823 = vmatpush2.msra.mxu0 0.0
        %824 = vmatprep.subr.mxu0 0.0
        %825 = vmatpush2.msra.mxu0 0.0
        %826 = vmatprep.subr.mxu0 0.0
        %827 = vmatpush2.msra.mxu0 0.0
        %828 = vmatprep.subr.mxu0 0.0
        %829 = vmatpush2.msra.mxu0 0.0
        %830 = vmatprep.subr.mxu0 0.0
        %831 = vmatpush2.msra.mxu0 0.0
        %832 = vmatprep.subr.mxu0 0.0
        %833 = vmatpush2.msra.mxu0 0.0
        %834 = vmatprep.subr.mxu0 0.0
        %835 = vmatpush2.msra.mxu0 0.0
        %836 = vmatprep.subr.mxu0 0.0
        %837 = vmatpush2.msra.mxu0 0.0
        %838 = vmatprep.subr.mxu0 0.0
        %839 = vmatpush2.msra.mxu0 0.0
        %840 = vmatprep.subr.mxu0 0.0
        %841 = vmatpush2.msra.mxu0 0.0
        %842 = vmatprep.subr.mxu0 0.0
        %843 = vmatpush2.msra.mxu0 0.0
        %844 = vmatprep.mubr.f32.mxu0 0.0
        %845 = vmatmul.mubr.f32.gmra.mxu0 %v417
        %v846 = vpop.f32.mrf.mxu0
        %v847 = vadd.f32 %v770, %v846
        %v848 = vpop.f32.mrf.mxu0
        %v849 = vadd.f32 %v772, %v848
        %850 = vmatprep.mubr.f32.mxu0 0.0
        %851 = vmatmul.mubr.f32.gmra.mxu0 %v420
        %v852 = vpop.f32.mrf.mxu0
        %v853 = vadd.f32 %v776, %v852
        %v854 = vpop.f32.mrf.mxu0
        %v855 = vadd.f32 %v778, %v854
        %856 = vdwg.mxu0
        %s857 = scalar_lea.vmem %s3, 64
        %v858 = vld [vmem:[%s857] sm:$0xff]
        %v859 = vld [vmem:[%s857 + $0x8] sm:$0xff]
        %v860 = vld [vmem:[%s857 + $0x10] sm:$0xff]
        %v861 = vld [vmem:[%s857 + $0x18] sm:$0xff]
        %862 = vmatprep.subr.mxu0 0.0
        %863 = vmatpush1.msra.mxu0 0.0
        %864 = vmatprep.subr.mxu0 0.0
        %865 = vmatpush1.msra.mxu0 0.0
        %866 = vmatprep.subr.mxu0 0.0
        %867 = vmatpush1.msra.mxu0 0.0
        %868 = vmatprep.subr.mxu0 0.0
        %869 = vmatpush1.msra.mxu0 0.0
        %870 = vmatprep.subr.mxu0 0.0
        %871 = vmatpush1.msra.mxu0 0.0
        %872 = vmatprep.subr.mxu0 0.0
        %873 = vmatpush1.msra.mxu0 0.0
        %874 = vmatprep.subr.mxu0 0.0
        %875 = vmatpush1.msra.mxu0 0.0
        %876 = vmatprep.subr.mxu0 0.0
        %877 = vmatpush1.msra.mxu0 0.0
        %878 = vmatprep.subr.mxu0 0.0
        %879 = vmatpush1.msra.mxu0 0.0
        %880 = vmatprep.subr.mxu0 0.0
        %881 = vmatpush1.msra.mxu0 0.0
        %882 = vmatprep.subr.mxu0 0.0
        %883 = vmatpush1.msra.mxu0 0.0
        %884 = vmatprep.subr.mxu0 0.0
        %885 = vmatpush1.msra.mxu0 0.0
        %886 = vmatprep.subr.mxu0 0.0
        %887 = vmatpush1.msra.mxu0 0.0
        %888 = vmatprep.subr.mxu0 0.0
        %889 = vmatpush1.msra.mxu0 0.0
        %890 = vmatprep.subr.mxu0 %v861
        %891 = vmatpush1.msra.mxu0 %v860
        %892 = vmatprep.subr.mxu0 %v859
        %893 = vmatpush1.msra.mxu0 %v858
        %894 = vmatprep.subr.mxu0 0.0
        %895 = vmatpush2.msra.mxu0 0.0
        %896 = vmatprep.subr.mxu0 0.0
        %897 = vmatpush2.msra.mxu0 0.0
        %898 = vmatprep.subr.mxu0 0.0
        %899 = vmatpush2.msra.mxu0 0.0
        %900 = vmatprep.subr.mxu0 0.0
        %901 = vmatpush2.msra.mxu0 0.0
        %902 = vmatprep.subr.mxu0 0.0
        %903 = vmatpush2.msra.mxu0 0.0
        %904 = vmatprep.subr.mxu0 0.0
        %905 = vmatpush2.msra.mxu0 0.0
        %906 = vmatprep.subr.mxu0 0.0
        %907 = vmatpush2.msra.mxu0 0.0
        %908 = vmatprep.subr.mxu0 0.0
        %909 = vmatpush2.msra.mxu0 0.0
        %910 = vmatprep.subr.mxu0 0.0
        %911 = vmatpush2.msra.mxu0 0.0
        %912 = vmatprep.subr.mxu0 0.0
        %913 = vmatpush2.msra.mxu0 0.0
        %914 = vmatprep.subr.mxu0 0.0
        %915 = vmatpush2.msra.mxu0 0.0
        %916 = vmatprep.subr.mxu0 0.0
        %917 = vmatpush2.msra.mxu0 0.0
        %918 = vmatprep.subr.mxu0 0.0
        %919 = vmatpush2.msra.mxu0 0.0
        %920 = vmatprep.subr.mxu0 0.0
        %921 = vmatpush2.msra.mxu0 0.0
        %922 = vmatprep.subr.mxu0 0.0
        %923 = vmatpush2.msra.mxu0 0.0
        %924 = vmatprep.subr.mxu0 0.0
        %925 = vmatpush2.msra.mxu0 0.0
        %926 = vmatprep.mubr.f32.mxu0 0.0
        %927 = vmatmul.mubr.f32.gmra.mxu0 %v508
        %v928 = vpop.f32.mrf.mxu0
        %v929 = vadd.f32 0.0, %v928
        %v930 = vpop.f32.mrf.mxu0
        %v931 = vadd.f32 0.0, %v930
        %932 = vmatprep.mubr.f32.mxu0 0.0
        %933 = vmatmul.mubr.f32.gmra.mxu0 %v511
        %v934 = vpop.f32.mrf.mxu0
        %v935 = vadd.f32 0.0, %v934
        %v936 = vpop.f32.mrf.mxu0
        %v937 = vadd.f32 0.0, %v936
        %938 = vdwg.mxu0
        %v939 = vadd.f32 %v847, %v929
        %v940 = vadd.f32 %v849, %v931
        %v941 = vadd.f32 %v853, %v935
        %v942 = vadd.f32 %v855, %v937
        %s943 = scalar_lea.vmem %s3, 96
        %v944 = vld [vmem:[%s943] sm:$0xff]
        %v945 = vld [vmem:[%s943 + $0x8] sm:$0xff]
        %v946 = vld [vmem:[%s943 + $0x10] sm:$0xff]
        %v947 = vld [vmem:[%s943 + $0x18] sm:$0xff]
        %948 = vmatprep.subr.mxu0 0.0
        %949 = vmatpush1.msra.mxu0 0.0
        %950 = vmatprep.subr.mxu0 0.0
        %951 = vmatpush1.msra.mxu0 0.0
        %952 = vmatprep.subr.mxu0 0.0
        %953 = vmatpush1.msra.mxu0 0.0
        %954 = vmatprep.subr.mxu0 0.0
        %955 = vmatpush1.msra.mxu0 0.0
        %956 = vmatprep.subr.mxu0 0.0
        %957 = vmatpush1.msra.mxu0 0.0
        %958 = vmatprep.subr.mxu0 0.0
        %959 = vmatpush1.msra.mxu0 0.0
        %960 = vmatprep.subr.mxu0 0.0
        %961 = vmatpush1.msra.mxu0 0.0
        %962 = vmatprep.subr.mxu0 0.0
        %963 = vmatpush1.msra.mxu0 0.0
        %964 = vmatprep.subr.mxu0 0.0
        %965 = vmatpush1.msra.mxu0 0.0
        %966 = vmatprep.subr.mxu0 0.0
        %967 = vmatpush1.msra.mxu0 0.0
        %968 = vmatprep.subr.mxu0 0.0
        %969 = vmatpush1.msra.mxu0 0.0
        %970 = vmatprep.subr.mxu0 0.0
        %971 = vmatpush1.msra.mxu0 0.0
        %972 = vmatprep.subr.mxu0 0.0
        %973 = vmatpush1.msra.mxu0 0.0
        %974 = vmatprep.subr.mxu0 0.0
        %975 = vmatpush1.msra.mxu0 0.0
        %976 = vmatprep.subr.mxu0 %v947
        %977 = vmatpush1.msra.mxu0 %v946
        %978 = vmatprep.subr.mxu0 %v945
        %979 = vmatpush1.msra.mxu0 %v944
        %980 = vmatprep.subr.mxu0 0.0
        %981 = vmatpush2.msra.mxu0 0.0
        %982 = vmatprep.subr.mxu0 0.0
        %983 = vmatpush2.msra.mxu0 0.0
        %984 = vmatprep.subr.mxu0 0.0
        %985 = vmatpush2.msra.mxu0 0.0
        %986 = vmatprep.subr.mxu0 0.0
        %987 = vmatpush2.msra.mxu0 0.0
        %988 = vmatprep.subr.mxu0 0.0
        %989 = vmatpush2.msra.mxu0 0.0
        %990 = vmatprep.subr.mxu0 0.0
        %991 = vmatpush2.msra.mxu0 0.0
        %992 = vmatprep.subr.mxu0 0.0
        %993 = vmatpush2.msra.mxu0 0.0
        %994 = vmatprep.subr.mxu0 0.0
        %995 = vmatpush2.msra.mxu0 0.0
        %996 = vmatprep.subr.mxu0 0.0
        %997 = vmatpush2.msra.mxu0 0.0
        %998 = vmatprep.subr.mxu0 0.0
        %999 = vmatpush2.msra.mxu0 0.0
        %1000 = vmatprep.subr.mxu0 0.0
        %1001 = vmatpush2.msra.mxu0 0.0
        %1002 = vmatprep.subr.mxu0 0.0
        %1003 = vmatpush2.msra.mxu0 0.0
        %1004 = vmatprep.subr.mxu0 0.0
        %1005 = vmatpush2.msra.mxu0 0.0
        %1006 = vmatprep.subr.mxu0 0.0
        %1007 = vmatpush2.msra.mxu0 0.0
        %1008 = vmatprep.subr.mxu0 0.0
        %1009 = vmatpush2.msra.mxu0 0.0
        %1010 = vmatprep.subr.mxu0 0.0
        %1011 = vmatpush2.msra.mxu0 0.0
        %1012 = vmatprep.mubr.f32.mxu0 0.0
        %1013 = vmatmul.mubr.f32.gmra.mxu0 %v603
        %v1014 = vpop.f32.mrf.mxu0
        %v1015 = vadd.f32 0.0, %v1014
        %v1016 = vpop.f32.mrf.mxu0
        %v1017 = vadd.f32 0.0, %v1016
        %1018 = vmatprep.mubr.f32.mxu0 0.0
        %1019 = vmatmul.mubr.f32.gmra.mxu0 %v606
        %v1020 = vpop.f32.mrf.mxu0
        %v1021 = vadd.f32 0.0, %v1020
        %v1022 = vpop.f32.mrf.mxu0
        %v1023 = vadd.f32 0.0, %v1022
        %1024 = vdwg.mxu0
        %v1025 = vadd.f32 %v939, %v1015
        %v1026 = vadd.f32 %v940, %v1017
        %v1027 = vadd.f32 %v941, %v1021
        %v1028 = vadd.f32 %v942, %v1023
        %v1029 = vstv %s317
        %v1030 = vadd.f32 %v1025, %v1029
        %v1031 = vadd.f32 %v1026, %v1029
        %v1032 = vadd.f32 %v1027, %v1029
        %v1033 = vadd.f32 %v1028, %v1029
        %v1034 = vld [vmem:[%s303] sm:$0xff]
        %v1035 = vld [vmem:[%s303 + $0x8] sm:$0xff]
        %s1036 = scalar_lea.vmem %s303, 16
        %v1037 = vld [vmem:[%s1036] sm:$0xff]
        %v1038 = vld [vmem:[%s1036 + $0x8] sm:$0xff]
        %v1040 = vsel %vm332, %v1037, 0
        %v1043 = vsel %vm332, %v1038, 0
        %1045 = vmatprep.subr.mxu0 0.0
        %1046 = vmatpush1.msra.mxu0 0.0
        %1047 = vmatprep.subr.mxu0 0.0
        %1048 = vmatpush1.msra.mxu0 0.0
        %1049 = vmatprep.subr.mxu0 0.0
        %1050 = vmatpush1.msra.mxu0 0.0
        %1051 = vmatprep.subr.mxu0 0.0
        %1052 = vmatpush1.msra.mxu0 0.0
        %1053 = vmatprep.subr.mxu0 0.0
        %1054 = vmatpush1.msra.mxu0 0.0
        %1055 = vmatprep.subr.mxu0 0.0
        %1056 = vmatpush1.msra.mxu0 0.0
        %1057 = vmatprep.subr.mxu0 0.0
        %1058 = vmatpush1.msra.mxu0 0.0
        %1059 = vmatprep.subr.mxu0 0.0
        %1060 = vmatpush1.msra.mxu0 0.0
        %1061 = vmatprep.subr.mxu0 0.0
        %1062 = vmatpush1.msra.mxu0 0.0
        %1063 = vmatprep.subr.mxu0 0.0
        %1064 = vmatpush1.msra.mxu0 0.0
        %1065 = vmatprep.subr.mxu0 0.0
        %1066 = vmatpush1.msra.mxu0 0.0
        %1067 = vmatprep.subr.mxu0 0.0
        %1068 = vmatpush1.msra.mxu0 0.0
        %1069 = vmatprep.subr.mxu0 0.0
        %1070 = vmatpush1.msra.mxu0 0.0
        %1071 = vmatprep.subr.mxu0 0.0
        %1072 = vmatpush1.msra.mxu0 0.0
        %1073 = vmatprep.subr.mxu0 %v331
        %1074 = vmatpush1.msra.mxu0 %v330
        %1075 = vmatprep.subr.mxu0 %v329
        %1076 = vmatpush1.msra.mxu0 %v328
        %1077 = vmatprep.subr.mxu0 0.0
        %1078 = vmatpush2.msra.mxu0 0.0
        %1079 = vmatprep.subr.mxu0 0.0
        %1080 = vmatpush2.msra.mxu0 0.0
        %1081 = vmatprep.subr.mxu0 0.0
        %1082 = vmatpush2.msra.mxu0 0.0
        %1083 = vmatprep.subr.mxu0 0.0
        %1084 = vmatpush2.msra.mxu0 0.0
        %1085 = vmatprep.subr.mxu0 0.0
        %1086 = vmatpush2.msra.mxu0 0.0
        %1087 = vmatprep.subr.mxu0 0.0
        %1088 = vmatpush2.msra.mxu0 0.0
        %1089 = vmatprep.subr.mxu0 0.0
        %1090 = vmatpush2.msra.mxu0 0.0
        %1091 = vmatprep.subr.mxu0 0.0
        %1092 = vmatpush2.msra.mxu0 0.0
        %1093 = vmatprep.subr.mxu0 0.0
        %1094 = vmatpush2.msra.mxu0 0.0
        %1095 = vmatprep.subr.mxu0 0.0
        %1096 = vmatpush2.msra.mxu0 0.0
        %1097 = vmatprep.subr.mxu0 0.0
        %1098 = vmatpush2.msra.mxu0 0.0
        %1099 = vmatprep.subr.mxu0 0.0
        %1100 = vmatpush2.msra.mxu0 0.0
        %1101 = vmatprep.subr.mxu0 0.0
        %1102 = vmatpush2.msra.mxu0 0.0
        %1103 = vmatprep.subr.mxu0 0.0
        %1104 = vmatpush2.msra.mxu0 0.0
        %1105 = vmatprep.subr.mxu0 0.0
        %1106 = vmatpush2.msra.mxu0 0.0
        %1107 = vmatprep.subr.mxu0 0.0
        %1108 = vmatpush2.msra.mxu0 0.0
        %1109 = vmatprep.mubr.f32.mxu0 0.0
        %1110 = vmatmul.mubr.f32.gmra.mxu0 %v1040
        %v1111 = vpop.f32.mrf.mxu0
        %v1112 = vadd.f32 0.0, %v1111
        %v1113 = vpop.f32.mrf.mxu0
        %v1114 = vadd.f32 0.0, %v1113
        %1115 = vmatprep.mubr.f32.mxu0 0.0
        %1116 = vmatmul.mubr.f32.gmra.mxu0 %v1043
        %v1117 = vpop.f32.mrf.mxu0
        %v1118 = vadd.f32 0.0, %v1117
        %v1119 = vpop.f32.mrf.mxu0
        %v1120 = vadd.f32 0.0, %v1119
        %1121 = vdwg.mxu0
        %v1123 = vsel %vm332, %v1034, 0
        %v1126 = vsel %vm332, %v1035, 0
        %1128 = vmatprep.subr.mxu0 0.0
        %1129 = vmatpush1.msra.mxu0 0.0
        %1130 = vmatprep.subr.mxu0 0.0
        %1131 = vmatpush1.msra.mxu0 0.0
        %1132 = vmatprep.subr.mxu0 0.0
        %1133 = vmatpush1.msra.mxu0 0.0
        %1134 = vmatprep.subr.mxu0 0.0
        %1135 = vmatpush1.msra.mxu0 0.0
        %1136 = vmatprep.subr.mxu0 0.0
        %1137 = vmatpush1.msra.mxu0 0.0
        %1138 = vmatprep.subr.mxu0 0.0
        %1139 = vmatpush1.msra.mxu0 0.0
        %1140 = vmatprep.subr.mxu0 0.0
        %1141 = vmatpush1.msra.mxu0 0.0
        %1142 = vmatprep.subr.mxu0 0.0
        %1143 = vmatpush1.msra.mxu0 0.0
        %1144 = vmatprep.subr.mxu0 0.0
        %1145 = vmatpush1.msra.mxu0 0.0
        %1146 = vmatprep.subr.mxu0 0.0
        %1147 = vmatpush1.msra.mxu0 0.0
        %1148 = vmatprep.subr.mxu0 0.0
        %1149 = vmatpush1.msra.mxu0 0.0
        %1150 = vmatprep.subr.mxu0 0.0
        %1151 = vmatpush1.msra.mxu0 0.0
        %1152 = vmatprep.subr.mxu0 0.0
        %1153 = vmatpush1.msra.mxu0 0.0
        %1154 = vmatprep.subr.mxu0 0.0
        %1155 = vmatpush1.msra.mxu0 0.0
        %1156 = vmatprep.subr.mxu0 %v323
        %1157 = vmatpush1.msra.mxu0 %v322
        %1158 = vmatprep.subr.mxu0 %v321
        %1159 = vmatpush1.msra.mxu0 %v320
        %1160 = vmatprep.subr.mxu0 0.0
        %1161 = vmatpush2.msra.mxu0 0.0
        %1162 = vmatprep.subr.mxu0 0.0
        %1163 = vmatpush2.msra.mxu0 0.0
        %1164 = vmatprep.subr.mxu0 0.0
        %1165 = vmatpush2.msra.mxu0 0.0
        %1166 = vmatprep.subr.mxu0 0.0
        %1167 = vmatpush2.msra.mxu0 0.0
        %1168 = vmatprep.subr.mxu0 0.0
        %1169 = vmatpush2.msra.mxu0 0.0
        %1170 = vmatprep.subr.mxu0 0.0
        %1171 = vmatpush2.msra.mxu0 0.0
        %1172 = vmatprep.subr.mxu0 0.0
        %1173 = vmatpush2.msra.mxu0 0.0
        %1174 = vmatprep.subr.mxu0 0.0
        %1175 = vmatpush2.msra.mxu0 0.0
        %1176 = vmatprep.subr.mxu0 0.0
        %1177 = vmatpush2.msra.mxu0 0.0
        %1178 = vmatprep.subr.mxu0 0.0
        %1179 = vmatpush2.msra.mxu0 0.0
        %1180 = vmatprep.subr.mxu0 0.0
        %1181 = vmatpush2.msra.mxu0 0.0
        %1182 = vmatprep.subr.mxu0 0.0
        %1183 = vmatpush2.msra.mxu0 0.0
        %1184 = vmatprep.subr.mxu0 0.0
        %1185 = vmatpush2.msra.mxu0 0.0
        %1186 = vmatprep.subr.mxu0 0.0
        %1187 = vmatpush2.msra.mxu0 0.0
        %1188 = vmatprep.subr.mxu0 0.0
        %1189 = vmatpush2.msra.mxu0 0.0
        %1190 = vmatprep.subr.mxu0 0.0
        %1191 = vmatpush2.msra.mxu0 0.0
        %1192 = vmatprep.mubr.f32.mxu0 0.0
        %1193 = vmatmul.mubr.f32.gmra.mxu0 %v1123
        %v1194 = vpop.f32.mrf.mxu0
        %v1195 = vadd.f32 %v1112, %v1194
        %v1196 = vpop.f32.mrf.mxu0
        %v1197 = vadd.f32 %v1114, %v1196
        %1198 = vmatprep.mubr.f32.mxu0 0.0
        %1199 = vmatmul.mubr.f32.gmra.mxu0 %v1126
        %v1200 = vpop.f32.mrf.mxu0
        %v1201 = vadd.f32 %v1118, %v1200
        %v1202 = vpop.f32.mrf.mxu0
        %v1203 = vadd.f32 %v1120, %v1202
        %1204 = vdwg.mxu0
        %s1205 = scalar_lea.vmem %s303, 32
        %v1206 = vld [vmem:[%s1205] sm:$0xff]
        %v1207 = vld [vmem:[%s1205 + $0x8] sm:$0xff]
        %v1209 = vsel %vm332, %v1206, 0
        %v1212 = vsel %vm332, %v1207, 0
        %1214 = vmatprep.subr.mxu0 0.0
        %1215 = vmatpush1.msra.mxu0 0.0
        %1216 = vmatprep.subr.mxu0 0.0
        %1217 = vmatpush1.msra.mxu0 0.0
        %1218 = vmatprep.subr.mxu0 0.0
        %1219 = vmatpush1.msra.mxu0 0.0
        %1220 = vmatprep.subr.mxu0 0.0
        %1221 = vmatpush1.msra.mxu0 0.0
        %1222 = vmatprep.subr.mxu0 0.0
        %1223 = vmatpush1.msra.mxu0 0.0
        %1224 = vmatprep.subr.mxu0 0.0
        %1225 = vmatpush1.msra.mxu0 0.0
        %1226 = vmatprep.subr.mxu0 0.0
        %1227 = vmatpush1.msra.mxu0 0.0
        %1228 = vmatprep.subr.mxu0 0.0
        %1229 = vmatpush1.msra.mxu0 0.0
        %1230 = vmatprep.subr.mxu0 0.0
        %1231 = vmatpush1.msra.mxu0 0.0
        %1232 = vmatprep.subr.mxu0 0.0
        %1233 = vmatpush1.msra.mxu0 0.0
        %1234 = vmatprep.subr.mxu0 0.0
        %1235 = vmatpush1.msra.mxu0 0.0
        %1236 = vmatprep.subr.mxu0 0.0
        %1237 = vmatpush1.msra.mxu0 0.0
        %1238 = vmatprep.subr.mxu0 0.0
        %1239 = vmatpush1.msra.mxu0 0.0
        %1240 = vmatprep.subr.mxu0 0.0
        %1241 = vmatpush1.msra.mxu0 0.0
        %1242 = vmatprep.subr.mxu0 %v506
        %1243 = vmatpush1.msra.mxu0 %v505
        %1244 = vmatprep.subr.mxu0 %v504
        %1245 = vmatpush1.msra.mxu0 %v503
        %1246 = vmatprep.subr.mxu0 0.0
        %1247 = vmatpush2.msra.mxu0 0.0
        %1248 = vmatprep.subr.mxu0 0.0
        %1249 = vmatpush2.msra.mxu0 0.0
        %1250 = vmatprep.subr.mxu0 0.0
        %1251 = vmatpush2.msra.mxu0 0.0
        %1252 = vmatprep.subr.mxu0 0.0
        %1253 = vmatpush2.msra.mxu0 0.0
        %1254 = vmatprep.subr.mxu0 0.0
        %1255 = vmatpush2.msra.mxu0 0.0
        %1256 = vmatprep.subr.mxu0 0.0
        %1257 = vmatpush2.msra.mxu0 0.0
        %1258 = vmatprep.subr.mxu0 0.0
        %1259 = vmatpush2.msra.mxu0 0.0
        %1260 = vmatprep.subr.mxu0 0.0
        %1261 = vmatpush2.msra.mxu0 0.0
        %1262 = vmatprep.subr.mxu0 0.0
        %1263 = vmatpush2.msra.mxu0 0.0
        %1264 = vmatprep.subr.mxu0 0.0
        %1265 = vmatpush2.msra.mxu0 0.0
        %1266 = vmatprep.subr.mxu0 0.0
        %1267 = vmatpush2.msra.mxu0 0.0
        %1268 = vmatprep.subr.mxu0 0.0
        %1269 = vmatpush2.msra.mxu0 0.0
        %1270 = vmatprep.subr.mxu0 0.0
        %1271 = vmatpush2.msra.mxu0 0.0
        %1272 = vmatprep.subr.mxu0 0.0
        %1273 = vmatpush2.msra.mxu0 0.0
        %1274 = vmatprep.subr.mxu0 0.0
        %1275 = vmatpush2.msra.mxu0 0.0
        %1276 = vmatprep.subr.mxu0 0.0
        %1277 = vmatpush2.msra.mxu0 0.0
        %1278 = vmatprep.mubr.f32.mxu0 0.0
        %1279 = vmatmul.mubr.f32.gmra.mxu0 %v1209
        %v1280 = vpop.f32.mrf.mxu0
        %v1281 = vadd.f32 0.0, %v1280
        %v1282 = vpop.f32.mrf.mxu0
        %v1283 = vadd.f32 0.0, %v1282
        %1284 = vmatprep.mubr.f32.mxu0 0.0
        %1285 = vmatmul.mubr.f32.gmra.mxu0 %v1212
        %v1286 = vpop.f32.mrf.mxu0
        %v1287 = vadd.f32 0.0, %v1286
        %v1288 = vpop.f32.mrf.mxu0
        %v1289 = vadd.f32 0.0, %v1288
        %1290 = vdwg.mxu0
        %v1291 = vadd.f32 %v1195, %v1281
        %v1292 = vadd.f32 %v1197, %v1283
        %v1293 = vadd.f32 %v1201, %v1287
        %v1294 = vadd.f32 %v1203, %v1289
        %s1295 = scalar_lea.vmem %s303, 48
        %v1296 = vld [vmem:[%s1295] sm:$0xff]
        %v1297 = vld [vmem:[%s1295 + $0x8] sm:$0xff]
        %v1299 = vsel %vm332, %v1296, 0
        %v1302 = vsel %vm332, %v1297, 0
        %1304 = vmatprep.subr.mxu0 0.0
        %1305 = vmatpush1.msra.mxu0 0.0
        %1306 = vmatprep.subr.mxu0 0.0
        %1307 = vmatpush1.msra.mxu0 0.0
        %1308 = vmatprep.subr.mxu0 0.0
        %1309 = vmatpush1.msra.mxu0 0.0
        %1310 = vmatprep.subr.mxu0 0.0
        %1311 = vmatpush1.msra.mxu0 0.0
        %1312 = vmatprep.subr.mxu0 0.0
        %1313 = vmatpush1.msra.mxu0 0.0
        %1314 = vmatprep.subr.mxu0 0.0
        %1315 = vmatpush1.msra.mxu0 0.0
        %1316 = vmatprep.subr.mxu0 0.0
        %1317 = vmatpush1.msra.mxu0 0.0
        %1318 = vmatprep.subr.mxu0 0.0
        %1319 = vmatpush1.msra.mxu0 0.0
        %1320 = vmatprep.subr.mxu0 0.0
        %1321 = vmatpush1.msra.mxu0 0.0
        %1322 = vmatprep.subr.mxu0 0.0
        %1323 = vmatpush1.msra.mxu0 0.0
        %1324 = vmatprep.subr.mxu0 0.0
        %1325 = vmatpush1.msra.mxu0 0.0
        %1326 = vmatprep.subr.mxu0 0.0
        %1327 = vmatpush1.msra.mxu0 0.0
        %1328 = vmatprep.subr.mxu0 0.0
        %1329 = vmatpush1.msra.mxu0 0.0
        %1330 = vmatprep.subr.mxu0 0.0
        %1331 = vmatpush1.msra.mxu0 0.0
        %1332 = vmatprep.subr.mxu0 %v601
        %1333 = vmatpush1.msra.mxu0 %v600
        %1334 = vmatprep.subr.mxu0 %v599
        %1335 = vmatpush1.msra.mxu0 %v598
        %1336 = vmatprep.subr.mxu0 0.0
        %1337 = vmatpush2.msra.mxu0 0.0
        %1338 = vmatprep.subr.mxu0 0.0
        %1339 = vmatpush2.msra.mxu0 0.0
        %1340 = vmatprep.subr.mxu0 0.0
        %1341 = vmatpush2.msra.mxu0 0.0
        %1342 = vmatprep.subr.mxu0 0.0
        %1343 = vmatpush2.msra.mxu0 0.0
        %1344 = vmatprep.subr.mxu0 0.0
        %1345 = vmatpush2.msra.mxu0 0.0
        %1346 = vmatprep.subr.mxu0 0.0
        %1347 = vmatpush2.msra.mxu0 0.0
        %1348 = vmatprep.subr.mxu0 0.0
        %1349 = vmatpush2.msra.mxu0 0.0
        %1350 = vmatprep.subr.mxu0 0.0
        %1351 = vmatpush2.msra.mxu0 0.0
        %1352 = vmatprep.subr.mxu0 0.0
        %1353 = vmatpush2.msra.mxu0 0.0
        %1354 = vmatprep.subr.mxu0 0.0
        %1355 = vmatpush2.msra.mxu0 0.0
        %1356 = vmatprep.subr.mxu0 0.0
        %1357 = vmatpush2.msra.mxu0 0.0
        %1358 = vmatprep.subr.mxu0 0.0
        %1359 = vmatpush2.msra.mxu0 0.0
        %1360 = vmatprep.subr.mxu0 0.0
        %1361 = vmatpush2.msra.mxu0 0.0
        %1362 = vmatprep.subr.mxu0 0.0
        %1363 = vmatpush2.msra.mxu0 0.0
        %1364 = vmatprep.subr.mxu0 0.0
        %1365 = vmatpush2.msra.mxu0 0.0
        %1366 = vmatprep.subr.mxu0 0.0
        %1367 = vmatpush2.msra.mxu0 0.0
        %1368 = vmatprep.mubr.f32.mxu0 0.0
        %1369 = vmatmul.mubr.f32.gmra.mxu0 %v1299
        %v1370 = vpop.f32.mrf.mxu0
        %v1371 = vadd.f32 0.0, %v1370
        %v1372 = vpop.f32.mrf.mxu0
        %v1373 = vadd.f32 0.0, %v1372
        %1374 = vmatprep.mubr.f32.mxu0 0.0
        %1375 = vmatmul.mubr.f32.gmra.mxu0 %v1302
        %v1376 = vpop.f32.mrf.mxu0
        %v1377 = vadd.f32 0.0, %v1376
        %v1378 = vpop.f32.mrf.mxu0
        %v1379 = vadd.f32 0.0, %v1378
        %1380 = vdwg.mxu0
        %v1381 = vadd.f32 %v1291, %v1371
        %v1382 = vadd.f32 %v1292, %v1373
        %v1383 = vadd.f32 %v1293, %v1377
        %v1384 = vadd.f32 %v1294, %v1379
        %v1385 = vadd.f32 %v1381, %v689
        %v1386 = vadd.f32 %v1382, %v689
        %v1387 = vadd.f32 %v1383, %v689
        %v1388 = vadd.f32 %v1384, %v689
        %1389 = vmatprep.subr.mxu0 0.0
        %1390 = vmatpush1.msra.mxu0 0.0
        %1391 = vmatprep.subr.mxu0 0.0
        %1392 = vmatpush1.msra.mxu0 0.0
        %1393 = vmatprep.subr.mxu0 0.0
        %1394 = vmatpush1.msra.mxu0 0.0
        %1395 = vmatprep.subr.mxu0 0.0
        %1396 = vmatpush1.msra.mxu0 0.0
        %1397 = vmatprep.subr.mxu0 0.0
        %1398 = vmatpush1.msra.mxu0 0.0
        %1399 = vmatprep.subr.mxu0 0.0
        %1400 = vmatpush1.msra.mxu0 0.0
        %1401 = vmatprep.subr.mxu0 0.0
        %1402 = vmatpush1.msra.mxu0 0.0
        %1403 = vmatprep.subr.mxu0 0.0
        %1404 = vmatpush1.msra.mxu0 0.0
        %1405 = vmatprep.subr.mxu0 0.0
        %1406 = vmatpush1.msra.mxu0 0.0
        %1407 = vmatprep.subr.mxu0 0.0
        %1408 = vmatpush1.msra.mxu0 0.0
        %1409 = vmatprep.subr.mxu0 0.0
        %1410 = vmatpush1.msra.mxu0 0.0
        %1411 = vmatprep.subr.mxu0 0.0
        %1412 = vmatpush1.msra.mxu0 0.0
        %1413 = vmatprep.subr.mxu0 0.0
        %1414 = vmatpush1.msra.mxu0 0.0
        %1415 = vmatprep.subr.mxu0 0.0
        %1416 = vmatpush1.msra.mxu0 0.0
        %1417 = vmatprep.subr.mxu0 %v702
        %1418 = vmatpush1.msra.mxu0 %v701
        %1419 = vmatprep.subr.mxu0 %v700
        %1420 = vmatpush1.msra.mxu0 %v699
        %1421 = vmatprep.subr.mxu0 0.0
        %1422 = vmatpush2.msra.mxu0 0.0
        %1423 = vmatprep.subr.mxu0 0.0
        %1424 = vmatpush2.msra.mxu0 0.0
        %1425 = vmatprep.subr.mxu0 0.0
        %1426 = vmatpush2.msra.mxu0 0.0
        %1427 = vmatprep.subr.mxu0 0.0
        %1428 = vmatpush2.msra.mxu0 0.0
        %1429 = vmatprep.subr.mxu0 0.0
        %1430 = vmatpush2.msra.mxu0 0.0
        %1431 = vmatprep.subr.mxu0 0.0
        %1432 = vmatpush2.msra.mxu0 0.0
        %1433 = vmatprep.subr.mxu0 0.0
        %1434 = vmatpush2.msra.mxu0 0.0
        %1435 = vmatprep.subr.mxu0 0.0
        %1436 = vmatpush2.msra.mxu0 0.0
        %1437 = vmatprep.subr.mxu0 0.0
        %1438 = vmatpush2.msra.mxu0 0.0
        %1439 = vmatprep.subr.mxu0 0.0
        %1440 = vmatpush2.msra.mxu0 0.0
        %1441 = vmatprep.subr.mxu0 0.0
        %1442 = vmatpush2.msra.mxu0 0.0
        %1443 = vmatprep.subr.mxu0 0.0
        %1444 = vmatpush2.msra.mxu0 0.0
        %1445 = vmatprep.subr.mxu0 0.0
        %1446 = vmatpush2.msra.mxu0 0.0
        %1447 = vmatprep.subr.mxu0 0.0
        %1448 = vmatpush2.msra.mxu0 0.0
        %1449 = vmatprep.subr.mxu0 0.0
        %1450 = vmatpush2.msra.mxu0 0.0
        %1451 = vmatprep.subr.mxu0 0.0
        %1452 = vmatpush2.msra.mxu0 0.0
        %1453 = vmatprep.mubr.f32.mxu0 0.0
        %1454 = vmatmul.mubr.f32.gmra.mxu0 %v1040
        %v1455 = vpop.f32.mrf.mxu0
        %v1456 = vadd.f32 0.0, %v1455
        %v1457 = vpop.f32.mrf.mxu0
        %v1458 = vadd.f32 0.0, %v1457
        %1459 = vmatprep.mubr.f32.mxu0 0.0
        %1460 = vmatmul.mubr.f32.gmra.mxu0 %v1043
        %v1461 = vpop.f32.mrf.mxu0
        %v1462 = vadd.f32 0.0, %v1461
        %v1463 = vpop.f32.mrf.mxu0
        %v1464 = vadd.f32 0.0, %v1463
        %1465 = vdwg.mxu0
        %1466 = vmatprep.subr.mxu0 0.0
        %1467 = vmatpush1.msra.mxu0 0.0
        %1468 = vmatprep.subr.mxu0 0.0
        %1469 = vmatpush1.msra.mxu0 0.0
        %1470 = vmatprep.subr.mxu0 0.0
        %1471 = vmatpush1.msra.mxu0 0.0
        %1472 = vmatprep.subr.mxu0 0.0
        %1473 = vmatpush1.msra.mxu0 0.0
        %1474 = vmatprep.subr.mxu0 0.0
        %1475 = vmatpush1.msra.mxu0 0.0
        %1476 = vmatprep.subr.mxu0 0.0
        %1477 = vmatpush1.msra.mxu0 0.0
        %1478 = vmatprep.subr.mxu0 0.0
        %1479 = vmatpush1.msra.mxu0 0.0
        %1480 = vmatprep.subr.mxu0 0.0
        %1481 = vmatpush1.msra.mxu0 0.0
        %1482 = vmatprep.subr.mxu0 0.0
        %1483 = vmatpush1.msra.mxu0 0.0
        %1484 = vmatprep.subr.mxu0 0.0
        %1485 = vmatpush1.msra.mxu0 0.0
        %1486 = vmatprep.subr.mxu0 0.0
        %1487 = vmatpush1.msra.mxu0 0.0
        %1488 = vmatprep.subr.mxu0 0.0
        %1489 = vmatpush1.msra.mxu0 0.0
        %1490 = vmatprep.subr.mxu0 0.0
        %1491 = vmatpush1.msra.mxu0 0.0
        %1492 = vmatprep.subr.mxu0 0.0
        %1493 = vmatpush1.msra.mxu0 0.0
        %1494 = vmatprep.subr.mxu0 %v697
        %1495 = vmatpush1.msra.mxu0 %v696
        %1496 = vmatprep.subr.mxu0 %v695
        %1497 = vmatpush1.msra.mxu0 %v694
        %1498 = vmatprep.subr.mxu0 0.0
        %1499 = vmatpush2.msra.mxu0 0.0
        %1500 = vmatprep.subr.mxu0 0.0
        %1501 = vmatpush2.msra.mxu0 0.0
        %1502 = vmatprep.subr.mxu0 0.0
        %1503 = vmatpush2.msra.mxu0 0.0
        %1504 = vmatprep.subr.mxu0 0.0
        %1505 = vmatpush2.msra.mxu0 0.0
        %1506 = vmatprep.subr.mxu0 0.0
        %1507 = vmatpush2.msra.mxu0 0.0
        %1508 = vmatprep.subr.mxu0 0.0
        %1509 = vmatpush2.msra.mxu0 0.0
        %1510 = vmatprep.subr.mxu0 0.0
        %1511 = vmatpush2.msra.mxu0 0.0
        %1512 = vmatprep.subr.mxu0 0.0
        %1513 = vmatpush2.msra.mxu0 0.0
        %1514 = vmatprep.subr.mxu0 0.0
        %1515 = vmatpush2.msra.mxu0 0.0
        %1516 = vmatprep.subr.mxu0 0.0
        %1517 = vmatpush2.msra.mxu0 0.0
        %1518 = vmatprep.subr.mxu0 0.0
        %1519 = vmatpush2.msra.mxu0 0.0
        %1520 = vmatprep.subr.mxu0 0.0
        %1521 = vmatpush2.msra.mxu0 0.0
        %1522 = vmatprep.subr.mxu0 0.0
        %1523 = vmatpush2.msra.mxu0 0.0
        %1524 = vmatprep.subr.mxu0 0.0
        %1525 = vmatpush2.msra.mxu0 0.0
        %1526 = vmatprep.subr.mxu0 0.0
        %1527 = vmatpush2.msra.mxu0 0.0
        %1528 = vmatprep.subr.mxu0 0.0
        %1529 = vmatpush2.msra.mxu0 0.0
        %1530 = vmatprep.mubr.f32.mxu0 0.0
        %1531 = vmatmul.mubr.f32.gmra.mxu0 %v1123
        %v1532 = vpop.f32.mrf.mxu0
        %v1533 = vadd.f32 %v1456, %v1532
        %v1534 = vpop.f32.mrf.mxu0
        %v1535 = vadd.f32 %v1458, %v1534
        %1536 = vmatprep.mubr.f32.mxu0 0.0
        %1537 = vmatmul.mubr.f32.gmra.mxu0 %v1126
        %v1538 = vpop.f32.mrf.mxu0
        %v1539 = vadd.f32 %v1462, %v1538
        %v1540 = vpop.f32.mrf.mxu0
        %v1541 = vadd.f32 %v1464, %v1540
        %1542 = vdwg.mxu0
        %1543 = vmatprep.subr.mxu0 0.0
        %1544 = vmatpush1.msra.mxu0 0.0
        %1545 = vmatprep.subr.mxu0 0.0
        %1546 = vmatpush1.msra.mxu0 0.0
        %1547 = vmatprep.subr.mxu0 0.0
        %1548 = vmatpush1.msra.mxu0 0.0
        %1549 = vmatprep.subr.mxu0 0.0
        %1550 = vmatpush1.msra.mxu0 0.0
        %1551 = vmatprep.subr.mxu0 0.0
        %1552 = vmatpush1.msra.mxu0 0.0
        %1553 = vmatprep.subr.mxu0 0.0
        %1554 = vmatpush1.msra.mxu0 0.0
        %1555 = vmatprep.subr.mxu0 0.0
        %1556 = vmatpush1.msra.mxu0 0.0
        %1557 = vmatprep.subr.mxu0 0.0
        %1558 = vmatpush1.msra.mxu0 0.0
        %1559 = vmatprep.subr.mxu0 0.0
        %1560 = vmatpush1.msra.mxu0 0.0
        %1561 = vmatprep.subr.mxu0 0.0
        %1562 = vmatpush1.msra.mxu0 0.0
        %1563 = vmatprep.subr.mxu0 0.0
        %1564 = vmatpush1.msra.mxu0 0.0
        %1565 = vmatprep.subr.mxu0 0.0
        %1566 = vmatpush1.msra.mxu0 0.0
        %1567 = vmatprep.subr.mxu0 0.0
        %1568 = vmatpush1.msra.mxu0 0.0
        %1569 = vmatprep.subr.mxu0 0.0
        %1570 = vmatpush1.msra.mxu0 0.0
        %1571 = vmatprep.subr.mxu0 %v861
        %1572 = vmatpush1.msra.mxu0 %v860
        %1573 = vmatprep.subr.mxu0 %v859
        %1574 = vmatpush1.msra.mxu0 %v858
        %1575 = vmatprep.subr.mxu0 0.0
        %1576 = vmatpush2.msra.mxu0 0.0
        %1577 = vmatprep.subr.mxu0 0.0
        %1578 = vmatpush2.msra.mxu0 0.0
        %1579 = vmatprep.subr.mxu0 0.0
        %1580 = vmatpush2.msra.mxu0 0.0
        %1581 = vmatprep.subr.mxu0 0.0
        %1582 = vmatpush2.msra.mxu0 0.0
        %1583 = vmatprep.subr.mxu0 0.0
        %1584 = vmatpush2.msra.mxu0 0.0
        %1585 = vmatprep.subr.mxu0 0.0
        %1586 = vmatpush2.msra.mxu0 0.0
        %1587 = vmatprep.subr.mxu0 0.0
        %1588 = vmatpush2.msra.mxu0 0.0
        %1589 = vmatprep.subr.mxu0 0.0
        %1590 = vmatpush2.msra.mxu0 0.0
        %1591 = vmatprep.subr.mxu0 0.0
        %1592 = vmatpush2.msra.mxu0 0.0
        %1593 = vmatprep.subr.mxu0 0.0
        %1594 = vmatpush2.msra.mxu0 0.0
        %1595 = vmatprep.subr.mxu0 0.0
        %1596 = vmatpush2.msra.mxu0 0.0
        %1597 = vmatprep.subr.mxu0 0.0
        %1598 = vmatpush2.msra.mxu0 0.0
        %1599 = vmatprep.subr.mxu0 0.0
        %1600 = vmatpush2.msra.mxu0 0.0
        %1601 = vmatprep.subr.mxu0 0.0
        %1602 = vmatpush2.msra.mxu0 0.0
        %1603 = vmatprep.subr.mxu0 0.0
        %1604 = vmatpush2.msra.mxu0 0.0
        %1605 = vmatprep.subr.mxu0 0.0
        %1606 = vmatpush2.msra.mxu0 0.0
        %1607 = vmatprep.mubr.f32.mxu0 0.0
        %1608 = vmatmul.mubr.f32.gmra.mxu0 %v1209
        %v1609 = vpop.f32.mrf.mxu0
        %v1610 = vadd.f32 0.0, %v1609
        %v1611 = vpop.f32.mrf.mxu0
        %v1612 = vadd.f32 0.0, %v1611
        %1613 = vmatprep.mubr.f32.mxu0 0.0
        %1614 = vmatmul.mubr.f32.gmra.mxu0 %v1212
        %v1615 = vpop.f32.mrf.mxu0
        %v1616 = vadd.f32 0.0, %v1615
        %v1617 = vpop.f32.mrf.mxu0
        %v1618 = vadd.f32 0.0, %v1617
        %1619 = vdwg.mxu0
        %v1620 = vadd.f32 %v1533, %v1610
        %v1621 = vadd.f32 %v1535, %v1612
        %v1622 = vadd.f32 %v1539, %v1616
        %v1623 = vadd.f32 %v1541, %v1618
        %1624 = vmatprep.subr.mxu0 0.0
        %1625 = vmatpush1.msra.mxu0 0.0
        %1626 = vmatprep.subr.mxu0 0.0
        %1627 = vmatpush1.msra.mxu0 0.0
        %1628 = vmatprep.subr.mxu0 0.0
        %1629 = vmatpush1.msra.mxu0 0.0
        %1630 = vmatprep.subr.mxu0 0.0
        %1631 = vmatpush1.msra.mxu0 0.0
        %1632 = vmatprep.subr.mxu0 0.0
        %1633 = vmatpush1.msra.mxu0 0.0
        %1634 = vmatprep.subr.mxu0 0.0
        %1635 = vmatpush1.msra.mxu0 0.0
        %1636 = vmatprep.subr.mxu0 0.0
        %1637 = vmatpush1.msra.mxu0 0.0
        %1638 = vmatprep.subr.mxu0 0.0
        %1639 = vmatpush1.msra.mxu0 0.0
        %1640 = vmatprep.subr.mxu0 0.0
        %1641 = vmatpush1.msra.mxu0 0.0
        %1642 = vmatprep.subr.mxu0 0.0
        %1643 = vmatpush1.msra.mxu0 0.0
        %1644 = vmatprep.subr.mxu0 0.0
        %1645 = vmatpush1.msra.mxu0 0.0
        %1646 = vmatprep.subr.mxu0 0.0
        %1647 = vmatpush1.msra.mxu0 0.0
        %1648 = vmatprep.subr.mxu0 0.0
        %1649 = vmatpush1.msra.mxu0 0.0
        %1650 = vmatprep.subr.mxu0 0.0
        %1651 = vmatpush1.msra.mxu0 0.0
        %1652 = vmatprep.subr.mxu0 %v947
        %1653 = vmatpush1.msra.mxu0 %v946
        %1654 = vmatprep.subr.mxu0 %v945
        %1655 = vmatpush1.msra.mxu0 %v944
        %1656 = vmatprep.subr.mxu0 0.0
        %1657 = vmatpush2.msra.mxu0 0.0
        %1658 = vmatprep.subr.mxu0 0.0
        %1659 = vmatpush2.msra.mxu0 0.0
        %1660 = vmatprep.subr.mxu0 0.0
        %1661 = vmatpush2.msra.mxu0 0.0
        %1662 = vmatprep.subr.mxu0 0.0
        %1663 = vmatpush2.msra.mxu0 0.0
        %1664 = vmatprep.subr.mxu0 0.0
        %1665 = vmatpush2.msra.mxu0 0.0
        %1666 = vmatprep.subr.mxu0 0.0
        %1667 = vmatpush2.msra.mxu0 0.0
        %1668 = vmatprep.subr.mxu0 0.0
        %1669 = vmatpush2.msra.mxu0 0.0
        %1670 = vmatprep.subr.mxu0 0.0
        %1671 = vmatpush2.msra.mxu0 0.0
        %1672 = vmatprep.subr.mxu0 0.0
        %1673 = vmatpush2.msra.mxu0 0.0
        %1674 = vmatprep.subr.mxu0 0.0
        %1675 = vmatpush2.msra.mxu0 0.0
        %1676 = vmatprep.subr.mxu0 0.0
        %1677 = vmatpush2.msra.mxu0 0.0
        %1678 = vmatprep.subr.mxu0 0.0
        %1679 = vmatpush2.msra.mxu0 0.0
        %1680 = vmatprep.subr.mxu0 0.0
        %1681 = vmatpush2.msra.mxu0 0.0
        %1682 = vmatprep.subr.mxu0 0.0
        %1683 = vmatpush2.msra.mxu0 0.0
        %1684 = vmatprep.subr.mxu0 0.0
        %1685 = vmatpush2.msra.mxu0 0.0
        %1686 = vmatprep.subr.mxu0 0.0
        %1687 = vmatpush2.msra.mxu0 0.0
        %1688 = vmatprep.mubr.f32.mxu0 0.0
        %1689 = vmatmul.mubr.f32.gmra.mxu0 %v1299
        %v1690 = vpop.f32.mrf.mxu0
        %v1691 = vadd.f32 0.0, %v1690
        %v1692 = vpop.f32.mrf.mxu0
        %v1693 = vadd.f32 0.0, %v1692
        %1694 = vmatprep.mubr.f32.mxu0 0.0
        %1695 = vmatmul.mubr.f32.gmra.mxu0 %v1302
        %v1696 = vpop.f32.mrf.mxu0
        %v1697 = vadd.f32 0.0, %v1696
        %v1698 = vpop.f32.mrf.mxu0
        %v1699 = vadd.f32 0.0, %v1698
        %1700 = vdwg.mxu0
        %v1701 = vadd.f32 %v1620, %v1691
        %v1702 = vadd.f32 %v1621, %v1693
        %v1703 = vadd.f32 %v1622, %v1697
        %v1704 = vadd.f32 %v1623, %v1699
        %v1705 = vadd.f32 %v1701, %v1029
        %v1706 = vadd.f32 %v1702, %v1029
        %v1707 = vadd.f32 %v1703, %v1029
        %v1708 = vadd.f32 %v1704, %v1029
        %v1709 = vmul.f32 %v690, %v1385
        %v1710 = vmul.f32 %v691, %v1386
        %v1711 = vmul.f32 %v692, %v1387
        %v1712 = vmul.f32 %v693, %v1388
        %v1713 = vmul.f32 %v1030, %v1705
        %v1714 = vmul.f32 %v1031, %v1706
        %v1715 = vmul.f32 %v1032, %v1707
        %v1716 = vmul.f32 %v1033, %v1708
        %v1717 = vadd.f32 %v1709, %v1713
        %v1718 = vadd.f32 %v1710, %v1714
        %v1719 = vadd.f32 %v1711, %v1715
        %v1720 = vadd.f32 %v1712, %v1716
        %1721 = vst [vmem:[%s314] sm:$0xff] %v1717
        %1722 = vst [vmem:[%s314 + $0x8] sm:$0xff] %v1718
        %1723 = vst [vmem:[%s314 + $0x10] sm:$0xff] %v1719
        %1724 = vst [vmem:[%s314 + $0x18] sm:$0xff] %v1720
        %v1725 = vmul.f32 %v1030, %v1385
        %v1726 = vmul.f32 %v1031, %v1386
        %v1727 = vmul.f32 %v1032, %v1387
        %v1728 = vmul.f32 %v1033, %v1388
        %v1729 = vmul.f32 %v690, %v1705
        %v1730 = vmul.f32 %v691, %v1706
        %v1731 = vmul.f32 %v692, %v1707
        %v1732 = vmul.f32 %v693, %v1708
        %v1733 = vadd.f32 %v1725, %v1729
        %v1734 = vadd.f32 %v1726, %v1730
        %v1735 = vadd.f32 %v1727, %v1731
        %v1736 = vadd.f32 %v1728, %v1732
        %s1737 = scalar_lea.vmem %s314, 32
        %1738 = vst [vmem:[%s1737] sm:$0xff] %v1733
        %1739 = vst [vmem:[%s1737 + $0x8] sm:$0xff] %v1734
        %1740 = vst [vmem:[%s1737 + $0x10] sm:$0xff] %v1735
        %1741 = vst [vmem:[%s1737 + $0x18] sm:$0xff] %v1736
        %s1742 = smul.u32 2, %s22
        %p1743 = scmp.lt.s32.totalorder %s21, 1
        %s1744 = scalar_select %p1743, %s21, 1
        %p1745 = scmp.lt.s32.totalorder %s1742, 1
        %s1746 = scalar_select %p1745, %s1742, 1
        %s1747 = smul.addr %s1746, 2
        %s1748 = smul.addr %s1744, 8
        %s1749 = sadd.s32 %s1747, %s1748
        %s1750 = smul.addr %s1749, 8
        %s1751 = scalar_lea.vmem %s5, %s1750
        // Predicated region
        $region45: #{repatch_pallas.1} parent=39 // pred_check
          %p1752 = pneg %p168
        $region46: #{repatch_pallas.1} parent=39 // pred_check_branch
          %1754 = sbr.rel (%p1752) target = $region48
        $region47: #{repatch_pallas.1} parent=39 // pred_region
          %s1755 = smul.u32 2, %s22
        $region48: #{repatch_pallas.1} parent=39 // pred_fallthru
          _
      $region40: #{repatch_pallas.1} parent=5 // pred_fallthru
        _
      %p1756 = scmp.le.s32.totalorder 2, %s12
      // Predicated region
      $region49: #{repatch_pallas.1} parent=5 // pred_check
        %p1757 = pneg %p1756
      $region50: #{repatch_pallas.1} parent=5 // pred_check_branch
        %1759 = sbr.rel (%p1757) target = $region52
      $region51: #{repatch_pallas.1} parent=5 // pred_region
        %s1760 = ssub.s32 %s12, 2
        // Predicated region
        $region53: #{repatch_pallas.1} parent=51 // pred_check
          %p1761 = pneg %p174
        $region54: #{repatch_pallas.1} parent=51 // pred_check_branch
          %1763 = sbr.rel (%p1761) target = $region56
        $region55: #{repatch_pallas.1} parent=51 // pred_region
          %s1764 = smul.u32 2, %s24
          %p1765 = scmp.lt.s32.totalorder %s23, 1
          %s1766 = scalar_select %p1765, %s23, 1
          %p1767 = scmp.lt.s32.totalorder %s1764, 1
          %s1768 = scalar_select %p1767, %s1764, 1
          %s1769 = smul.addr %s1768, 2
          %s1770 = smul.addr %s1766, 8
          %s1771 = sadd.s32 %s1769, %s1770
          %s1772 = smul.addr %s1771, 8
          %s1773 = scalar_lea.vmem %s5, %s1772
        $region56: #{repatch_pallas.1} parent=51 // pred_fallthru
          _
      $region52: #{repatch_pallas.1} parent=5 // pred_fallthru
        _
    $region6: #{repatch_pallas.1} parent=1 // loop_footer
      %s16 = sadd.s32 1, %s12
    $region7: #{repatch_pallas.1} parent=1 // loop_footer_branch
      %11 = sbr.rel target = $region3
    $region8: #{repatch_pallas.1} parent=1 // loop_exit
      _
    %1774 = vsyncpa [#allocation3], 1
    %s1775 = scalar_lea.sflag [#allocation3], 1
    %1776 = vsyncpa %s1775, 1

</llo_original>
